<compile_context>
chip_gen: v7x
topology: tpu7x:2x2x1
jax: 0.10.0
libtpu: 0.0.40
codegen_flags: <defaults>
</compile_context>

<pallas_src>
import functools
import numpy as np
import jax
import jax.numpy as jnp
from jax import lax
from jax.experimental import pallas as pl
from jax.experimental.pallas import tpu as pltpu

LOG_2PI = float(np.log(2.0 * np.pi))
LANE = 128


def _vidx(i, j):
    """Row-wise lower-triangular vech index of (i, j), j <= i."""
    return i * (i + 1) // 2 + j


def _ceil_to(n, m):
    return int(-(-int(n) // m) * m)


def _fs(shape):
    """Full-array BlockSpec for grid=(1,)."""
    n = len(shape)
    return pl.BlockSpec(shape, lambda i, n=n: (0,) * n)


# ----------------------------- fused forward kernel --------------------------
def _vgp_fused_kernel(data_ref, gp_ref, wh_ref, whead_ref, bias_ref, kconst_ref,
                      out_ref, *, cfg):
    f32, bf16 = jnp.float32, jnp.bfloat16
    c = cfg
    b, x_dim, h_dim = c["b_sz"], c["x_dim"], c["h_dim"]
    f_in, f_out = c["f_in"], c["f_out"]
    z_dim, t_dim, nvt, d2h = c["z_dim"], c["t_dim"], c["nvt"], c["d2h"]
    sigma2, ldet1 = c["sigma2"], c["ldet1"]

    def dotb(a, w_bf):                       # bf16 MXU dot, f32 accumulate
        return jnp.dot(a.astype(bf16), w_bf, preferred_element_type=f32)

    def dotf(a, w):                          # f32 dot (GP / scatter / KLD math)
        return jnp.dot(a, w, preferred_element_type=f32)

    # ---------- unpack input slabs (static, lane/sublane aligned slices) -----
    x       = data_ref[:, c["d_x"]:c["d_x"] + x_dim]
    eps_xi  = data_ref[:, c["d_exi"]:c["d_exi"] + f_in]
    eps_f   = data_ref[:, c["d_ef"]:c["d_ef"] + f_out]
    eexp    = data_ref[:, c["d_eexp"]:c["d_eexp"] + t_dim * z_dim]

    s        = gp_ref[:, c["g_s"]:c["g_s"] + f_in]
    kss_inv  = gp_ref[:, c["g_kssi"]:c["g_kssi"] + b]
    kinv_t   = gp_ref[:, c["g_kt"]:c["g_kt"] + f_out]
    s2_cols  = gp_ref[:, c["g_s2"]:c["g_s2"] + b]       # s2_cols[i, j] = sum_k w_k s[j,k]^2

    w1  = wh_ref[c["r_w1"]:c["r_w1"] + x_dim, :]
    w2  = wh_ref[c["r_w2"]:c["r_w2"] + f_out, :]
    w3x = wh_ref[c["r_w3x"]:c["r_w3x"] + x_dim, :]
    w3z = wh_ref[c["r_w3z"]:c["r_w3z"] + z_dim, :]
    w4  = wh_ref[c["r_w4"]:c["r_w4"] + z_dim, :]

    w11 = whead_ref[:, c["c_w11"]:c["c_w11"] + c["w11_w"]]
    w21 = whead_ref[:, c["c_w21"]:c["c_w21"] + c["w21_w"]]
    w31 = whead_ref[:, c["c_w31"]:c["c_w31"] + c["w31_w"]]
    w41 = whead_ref[:, c["c_w41"]:c["c_w41"] + c["w41_w"]]

    def brow(key, width):
        o = c[key]
        return bias_ref[:, o:o + width]

    b1, b2 = brow("c_b1", h_dim), brow("c_b2", h_dim)
    b3, b4 = brow("c_b3", h_dim), brow("c_b4", h_dim)
    b11, b21 = brow("c_b11", c["w11_w"]), brow("c_b21", c["w21_w"])
    b31, b41 = brow("c_b31", c["w31_w"]), brow("c_b41", c["w41_w"])
    w_row = brow("c_wrow", f_in)
    vechI = brow("c_vechI", z_dim)
    dmask = brow("c_dmask", nvt)

    P    = kconst_ref[c["r_P"]:c["r_P"] + nvt, 0:t_dim * z_dim]
    R    = kconst_ref[c["r_R"]:c["r_R"] + t_dim * z_dim, 0:z_dim]
    Scol = kconst_ref[c["r_Scol"]:c["r_Scol"] + nvt, 0:t_dim * t_dim]
    BDiK = kconst_ref[c["r_BDiK"]:c["r_BDiK"] + t_dim * t_dim, 0:t_dim * t_dim]
    KZ   = kconst_ref[c["r_KZ"]:c["r_KZ"] + z_dim, 0:z_dim]

    # ---------------- encode_1 + reparameterize_nm ----------------
    h1 = jnp.maximum(dotb(x, w1) + b1, 0.0)
    q1 = dotb(h1, w11) + b11                               # (b, 256) lane-padded
    qxi_mean = q1[:, 0:f_in]
    qxi_lcov = q1[:, LANE:LANE + f_in]
    xi = jnp.exp(0.5 * qxi_lcov) * eps_xi + qxi_mean

    # ---------------- GP reparameterization (all f32) ----------------
    xiw = xi * w_row
    xi2 = jnp.sum(xiw * xi, axis=1, keepdims=True)         # (b, 1)
    cross = lax.dot_general(xiw, s, (((1,), (1,)), ((), ())),
                            preferred_element_type=f32)    # (b, b)
    d2 = xi2 + s2_cols - 2.0 * cross
    k_xis = sigma2 * jnp.exp(-0.5 * d2)                    # (b, b)
    kk_inv = dotf(k_xis, kss_inv)                          # (b, b)
    qf_mean = dotf(k_xis, kinv_t)                          # (b, f_out) = K_xis (K_ss^-1 t)
    qf_cov = jnp.maximum(sigma2 - jnp.sum(kk_inv * k_xis, axis=1, keepdims=True), 1e-8)
    f = jnp.sqrt(qf_cov) * eps_f + qf_mean

    # ---------------- encode_2 ----------------
    h2 = jnp.maximum(dotb(f, w2) + b2, 0.0)
    z_slab = dotb(h2, w21) + b21                           # (b, 256) lane-padded
    z_mean = z_slab[:, 0:z_dim]
    z_covh = z_slab[:, LANE:LANE + nvt]
    out_ref[:, c["o_z"]:c["o_z"] + c["w21_w"]] = z_slab    # lane-dense, aligned store

    # ---------------- reparameterize_lt: z = bivech(covh) @ eps + mean -------
    lexp = dotf(z_covh, P)                                 # (b, t_dim*z_dim)
    z = z_mean + dotf(lexp * eexp, R)                      # eexp precomputed in glue

    # ---------------- encode_3 (x||z via two summed dots; MRB-friendly) ------
    h3 = jnp.maximum(dotb(x, w3x) + dotb(z, w3z) + b3, 0.0)
    enc = dotb(h3, w31) + b31                              # (b, 512) lane-padded
    rxi_mean = enc[:, 0:f_in]
    rf_mean  = enc[:, LANE:LANE + f_out]
    rxi_lcov = enc[:, 2 * LANE:2 * LANE + f_in]
    rf_lcov  = enc[:, 3 * LANE:3 * LANE + f_out]

    # ---------------- decode ----------------
    h4 = jnp.maximum(dotb(z, w4) + b4, 0.0)
    dec = dotb(h4, w41) + b41                              # (b, 256) lane-padded
    x_mean = dec[:, 0:x_dim]
    x_lcov = dec[:, LANE:LANE + x_dim]
    out_ref[:, c["o_dec"]:c["o_dec"] + c["w41_w"]] = dec

    # ---------------- KLD (block-diagonal Gaussian prior) ----------------
    lcols = dotf(z_covh, Scol)                             # column-major vec(L)
    m = dotf(lcols, BDiK)                                  # (I (x) iK) vec(L)
    tr = float(d2h) * jnp.sum(m * lcols, keepdims=True)
    i_mu = vechI - z_mean
    a_q = dotf(i_mu, KZ)                                   # (iK (x) I_d2h) applied
    quad = jnp.sum(a_q * i_mu, keepdims=True)
    safe = jnp.where(dmask > 0.5, jnp.maximum(jnp.abs(z_covh), 1e-8), 1.0)
    ldet0 = 2.0 * float(d2h) * jnp.sum(jnp.log(safe), keepdims=True)
    kld_bkdg = 0.5 * (tr + quad - float(b * t_dim * d2h)
                      + float(ldet1) - ldet0) / float(b)

    # ---------------- KLD (diag Gaussians: q(f) vs r(f)) ----------------
    ls0 = jnp.log(qf_cov)                                  # (b, 1) broadcast over f_out
    s1_inv = jnp.exp(-rf_lcov)
    dmu = qf_mean - rf_mean
    kld_diag = 0.5 * jnp.sum(rf_lcov - ls0 - 1.0 + s1_inv * qf_cov
                             + dmu * dmu * s1_inv, keepdims=True) / float(b)

    # ---------------- Gaussian NLL terms (dist == 'gauss') ----------------
    def nll(mean, lcov, target):
        d = target - mean
        return 0.5 * jnp.sum(lcov + jnp.exp(-lcov) * d * d + LOG_2PI,
                             keepdims=True) / float(b)

    nll_tot = (nll(x_mean, x_lcov, x) - nll(qxi_mean, qxi_lcov, xi)
               + nll(rxi_mean, rxi_lcov, xi))

    out_ref[:, c["o_kld"]:c["o_kld"] + LANE] = jnp.broadcast_to(kld_bkdg + kld_diag, (b, LANE))
    out_ref[:, c["o_nll"]:c["o_nll"] + LANE] = jnp.broadcast_to(nll_tot, (b, LANE))


# ----------------------------- host-side packing helpers ---------------------
def _pack_cols(items, align=LANE):
    rows = items[0].shape[0]
    offs, cur = [], 0
    for a in items:
        assert a.ndim == 2 and a.shape[0] == rows
        offs.append(cur)
        cur += _ceil_to(a.shape[1], align)
    slab = np.zeros((rows, cur), np.float32)
    for o, a in zip(offs, items):
        slab[:, o:o + a.shape[1]] = a
    return slab, offs


def _pack_rows(items, align=8):
    width = max(a.shape[1] for a in items)
    offs, cur = [], 0
    for a in items:
        offs.append(cur)
        cur += _ceil_to(a.shape[0], align)
    slab = np.zeros((cur, width), np.float32)
    for o, a in zip(offs, items):
        slab[o:o + a.shape[0], :a.shape[1]] = a
    return slab, offs


def _pad128_cols(a):
    out = np.zeros((a.shape[0], _ceil_to(a.shape[1], LANE)), np.float32)
    out[:, :a.shape[1]] = a
    return out


def _head_concat(*mats):
    """Each sub-head padded to 128 lanes, then concatenated (segment k at 128*k)."""
    return np.concatenate([_pad128_cols(m) for m in mats], axis=1)


def build_const_mats(t_dim, d2h, iK):
    """Scatter / Kronecker matrices turning LT reparam and the block-diag KLD
    into plain matmuls inside the kernel (host-precomputed, row-wise vech)."""
    z_dim = t_dim * d2h
    nvt = t_dim * (t_dim + 1) // 2
    P = np.zeros((nvt, t_dim * z_dim), np.float32)
    for i in range(t_dim):
        for j in range(i + 1):
            P[_vidx(i, j), j * z_dim + i * d2h: j * z_dim + (i + 1) * d2h] = 1.0
    R = np.tile(np.eye(z_dim, dtype=np.float32), (t_dim, 1))
    Scol = np.zeros((nvt, t_dim * t_dim), np.float32)
    for i in range(t_dim):
        for m in range(i + 1):
            Scol[_vidx(i, m), m * t_dim + i] = 1.0
    BDiK = np.kron(np.eye(t_dim), iK).astype(np.float32)
    KZ = np.kron(iK, np.eye(d2h)).astype(np.float32)
    dmask = np.zeros((1, nvt), np.float32)
    for i in range(t_dim):
        dmask[0, _vidx(i, i)] = 1.0
    return {"P": P, "R": R, "Scol": Scol, "BDiK": BDiK, "KZ": KZ, "dmask": dmask}


def build_packed(p, consts, s_np, kss_inv_np, kinv_t_np, s2cols_np, dims):
    """Pack weights / constants / GP-parameter slabs once (host-side)."""
    x_dim, h_dim = dims["x_dim"], dims["h_dim"]
    f_in, f_out = dims["f_in"], dims["f_out"]
    z_dim, nvt, t_dim = dims["z_dim"], dims["nvt"], dims["t_dim"]
    b_sz = dims["b_sz"]
    assert max(f_in, f_out, z_dim, nvt, x_dim, b_sz) <= LANE
    cfg = dict(dims)

    # hidden-layer weights (row-stacked, bf16 on device)
    wh, r = _pack_rows([p["fc1_w"], p["fc2_w"], p["fc3_w"][:x_dim],
                        p["fc3_w"][x_dim:], p["fc4_w"]], align=16)
    cfg.update(r_w1=r[0], r_w2=r[1], r_w3x=r[2], r_w3z=r[3], r_w4=r[4])

    # fused head weights (each sub-head 128-lane padded, column-stacked, bf16)
    w11 = _head_concat(p["fc11_w"], p["fc12_w"])
    w21 = _head_concat(p["fc21_w"], p["fc22_w"])
    w31 = _head_concat(p["fc31_w"][:, :f_in], p["fc31_w"][:, f_in:],
                       p["fc32_w"][:, :f_in], p["fc32_w"][:, f_in:])
    w41 = _head_concat(p["fc41_w"], p["fc42_w"])
    whead, cw = _pack_cols([w11, w21, w31, w41])
    cfg.update(c_w11=cw[0], c_w21=cw[1], c_w31=cw[2], c_w41=cw[3],
               w11_w=w11.shape[1], w21_w=w21.shape[1],
               w31_w=w31.shape[1], w41_w=w41.shape[1])

    # biases + small row constants (f32, one (1, N) slab)
    def b_(name):
        return p[name + "_b"].reshape(1, -1)
    b11 = _head_concat(b_("fc11"), b_("fc12"))
    b21 = _head_concat(b_("fc21"), b_("fc22"))
    b31 = _head_concat(b_("fc31")[:, :f_in], b_("fc31")[:, f_in:],
                       b_("fc32")[:, :f_in], b_("fc32")[:, f_in:])
    b41 = _head_concat(b_("fc41"), b_("fc42"))
    bias, cb = _pack_cols([b_("fc1"), b_("fc2"), b_("fc3"), b_("fc4"),
                           b11, b21, b31, b41,
                           consts["w_row"], consts["vechI"], consts["dmask"]])
    cfg.update(c_b1=cb[0], c_b2=cb[1], c_b3=cb[2], c_b4=cb[3],
               c_b11=cb[4], c_b21=cb[5], c_b31=cb[6], c_b41=cb[7],
               c_wrow=cb[8], c_vechI=cb[9], c_dmask=cb[10])

    # scatter / Kronecker matrices (f32, row-stacked)
    kconst, rk = _pack_rows([consts["P"], consts["R"], consts["Scol"],
                             consts["BDiK"], consts["KZ"]], align=8)
    cfg.update(r_P=rk[0], r_R=rk[1], r_Scol=rk[2], r_BDiK=rk[3], r_KZ=rk[4])

    # GP parameter slab: s, K_ss^{-1}, K_ss^{-1} t, row norms of s (per step)
    gp, cg = _pack_cols([s_np, kss_inv_np, kinv_t_np, s2cols_np])
    cfg.update(g_s=cg[0], g_kssi=cg[1], g_kt=cg[2], g_s2=cg[3])

    # per-call data slab offsets (x, eps_xi, eps_f, Eexp)
    cfg.update(d_x=0, d_exi=LANE, d_ef=2 * LANE, d_eexp=3 * LANE,
               d_w=3 * LANE + _ceil_to(t_dim * z_dim, LANE))

    # output slab offsets
    o_z, o_dec = 0, w21.shape[1]
    o_kld = o_dec + w41.shape[1]
    o_nll = o_kld + LANE
    cfg.update(o_z=o_z, o_dec=o_dec, o_kld=o_kld, o_nll=o_nll, out_w=o_nll + LANE)

    packed = {
        "wh": jnp.asarray(wh, jnp.bfloat16),
        "whead": jnp.asarray(whead, jnp.bfloat16),
        "bias": jnp.asarray(bias, jnp.float32),
        "kconst": jnp.asarray(kconst, jnp.float32),
        "gp": jnp.asarray(gp, jnp.float32),
    }
    return packed, cfg


# ----------------------------- forward wrapper --------------------------------
def vgp_forward(packed, x, eps_xi, eps_f, eps_z, *, cfg):
    b = x.shape[0]
    t_dim, d2h, z_dim = cfg["t_dim"], cfg["d2h"], cfg["z_dim"]
    nvt, x_dim = cfg["nvt"], cfg["x_dim"]

    # eps_z @ Q expansion hoisted out of the kernel (pure data reshuffle).
    eexp = jnp.broadcast_to(eps_z.reshape(b, t_dim, 1, d2h),
                            (b, t_dim, t_dim, d2h)).reshape(b, t_dim * z_dim)

    def padc(a, w):
        return jnp.pad(a, ((0, 0), (0, w - a.shape[1])))

    data = jnp.concatenate([padc(x, LANE), padc(eps_xi, LANE), padc(eps_f, LANE),
                            padc(eexp, cfg["d_w"] - cfg["d_eexp"])], axis=1)

    kernel = functools.partial(_vgp_fused_kernel, cfg=cfg)
    args = (data, packed["gp"], packed["wh"], packed["whead"],
            packed["bias"], packed["kconst"])
    out = pl.pallas_call(
        kernel,
        out_shape=jax.ShapeDtypeStruct((b, cfg["out_w"]), jnp.float32),
        grid=(1,),
        in_specs=[_fs(a.shape) for a in args],
        out_specs=_fs((b, cfg["out_w"])),
        compiler_params=pltpu.CompilerParams(dimension_semantics=("arbitrary",)),
    )(*args)

    z_mean = out[:, cfg["o_z"]:cfg["o_z"] + z_dim]
    z_covh = out[:, cfg["o_z"] + LANE:cfg["o_z"] + LANE + nvt]
    x_mean = out[:, cfg["o_dec"]:cfg["o_dec"] + x_dim]
    x_lcov = out[:, cfg["o_dec"] + LANE:cfg["o_dec"] + LANE + x_dim]
    kld = out[0, cfg["o_kld"]]
    nll = out[0, cfg["o_nll"]]
    return kld, nll, (z_mean, z_covh), (x_mean, x_lcov)


# ----------------------------- parameter init ---------------------------------
def init_params(key, x_dim, h_dim, t_dim, f_in, f_out, z_dim, nvt):
    layers = {
        "fc1": (x_dim, h_dim), "fc11": (h_dim, f_in), "fc12": (h_dim, f_in),
        "fc2": (f_out, h_dim), "fc21": (h_dim, z_dim), "fc22": (h_dim, nvt),
        "fc3": (x_dim + z_dim, h_dim), "fc31": (h_dim, f_in + f_out),
        "fc32": (h_dim, f_in + f_out),
        "fc4": (z_dim, h_dim), "fc41": (h_dim, x_dim), "fc42": (h_dim, x_dim),
    }
    params = {}
    for name, (fi, fo) in layers.items():
        key, k1, k2 = jax.random.split(key, 3)
        bound = 1.0 / np.sqrt(fi)
        params[name + "_w"] = jax.random.uniform(k1, (fi, fo), jnp.float32, -bound, bound)
        params[name + "_b"] = jax.random.uniform(k2, (fo,), jnp.float32, -bound, bound)
    return params, key


# ----------------------------- pure-JAX reference (same bf16 cast points) -----
def ref_forward(params, s, t_ind, kss_inv, iK, w_row, vechI_t, x, eps_xi, eps_f,
                eps_z, dims):
    f32, bf16 = jnp.float32, jnp.bfloat16
    hi = jax.lax.Precision.HIGHEST
    f_in, f_out = dims["f_in"], dims["f_out"]
    z_dim, t_dim, d2h = dims["z_dim"], dims["t_dim"], dims["d2h"]
    sigma2, ldet1 = dims["sigma2"], dims["ldet1"]
    b = x.shape[0]

    def lin(name, a):
        return jnp.dot(a.astype(bf16), params[name + "_w"].astype(bf16),
                       preferred_element_type=f32) + params[name + "_b"]

    relu = lambda v: jnp.maximum(v, 0.0)
    h1 = relu(lin("fc1", x))
    qxi_mean, qxi_lcov = lin("fc11", h1), lin("fc12", h1)
    xi = jnp.exp(0.5 * qxi_lcov) * eps_xi + qxi_mean

    xiw = xi * w_row
    xi2 = jnp.sum(xiw * xi, 1, keepdims=True)
    s2 = jnp.sum((s * w_row) * s, 1, keepdims=True)
    d2 = xi2 + s2.T - 2.0 * jnp.dot(xiw, s.T, precision=hi)
    k_xis = sigma2 * jnp.exp(-0.5 * d2)
    kk_inv = jnp.dot(k_xis, kss_inv, precision=hi)
    qf_mean = jnp.dot(kk_inv, t_ind, precision=hi)
    qf_cov = jnp.maximum(sigma2 - jnp.sum(kk_inv * k_xis, 1, keepdims=True), 1e-8)
    f = jnp.sqrt(qf_cov) * eps_f + qf_mean

    h2 = relu(lin("fc2", f))
    z_mean, z_covh = lin("fc21", h2), lin("fc22", h2)

    idx = np.zeros((t_dim, t_dim), np.int32)
    for i in range(t_dim):
        for j in range(i + 1):
            idx[i, j] = _vidx(i, j)
    mask = np.tril(np.ones((t_dim, t_dim), np.float32))
    L = z_covh[:, idx] * mask
    z = jnp.matmul(L, eps_z.reshape(b, t_dim, d2h), precision=hi).reshape(b, -1) + z_mean

    h3 = relu(lin("fc3", jnp.concatenate([x, z], axis=1)))
    enc_mean, enc_lcov = lin("fc31", h3), lin("fc32", h3)
    rxi_mean, rf_mean = enc_mean[:, :f_in], enc_mean[:, f_in:]
    rxi_lcov, rf_lcov = enc_lcov[:, :f_in], enc_lcov[:, f_in:]
    h4 = relu(lin("fc4", z))
    x_mean, x_lcov = lin("fc41", h4), lin("fc42", h4)

    cov = jnp.matmul(L, jnp.swapaxes(L, 1, 2), precision=hi)
    tr = d2h * jnp.sum(iK[None] * cov)
    i_mu = vechI_t.reshape(1, t_dim, d2h) - z_mean.reshape(b, t_dim, d2h)
    quad = jnp.sum(jnp.einsum("ij,bjk->bik", iK, i_mu, precision=hi) * i_mu)
    diag_idx = np.array([_vidx(i, i) for i in range(t_dim)], np.int32)
    ldet0 = 2.0 * d2h * jnp.sum(jnp.log(jnp.maximum(jnp.abs(z_covh[:, diag_idx]), 1e-8)))
    kld_bkdg = 0.5 * (tr + quad - b * t_dim * d2h + ldet1 - ldet0) / b

    ls0 = jnp.log(qf_cov)
    s1_inv = jnp.exp(-rf_lcov)
    kld_diag = 0.5 * jnp.sum(rf_lcov - ls0 - 1.0 + s1_inv * qf_cov
                             + (qf_mean - rf_mean) ** 2 * s1_inv) / b

    def nll(mean, lcov, target):
        return 0.5 * jnp.sum(lcov + jnp.exp(-lcov) * (target - mean) ** 2 + LOG_2PI) / b

    nll_tot = nll(x_mean, x_lcov, x) - nll(qxi_mean, qxi_lcov, xi) + nll(rxi_mean, rxi_lcov, xi)
    return kld_bkdg + kld_diag, nll_tot, (z_mean, z_covh), (x_mean, x_lcov)


# ----------------------------- main --------------------------------------------
if __name__ == "__main__":
    x_dim, h_dim, t_dim = 16, 32, 4
    b_sz = 8
    d_dim = x_dim // t_dim                      # 4
    d2h = d_dim * (d_dim + 1) // 2              # 10
    z_dim = t_dim * d2h                         # 40
    nvt = t_dim * (t_dim + 1) // 2              # 10
    f_in, f_out = 20, 100
    sigma2 = 0.1

    # GP prior over the t grid (matches module __init__, host-side numpy)
    tgrid = np.linspace(0.0, 2.0, t_dim + 1)[1:].astype(np.float64)
    K = np.exp(-((tgrid[:, None] - tgrid[None, :]) ** 2) / 2.0 / 2.0) + 1e-4 * np.eye(t_dim)
    Kh = np.linalg.cholesky(K)
    iK = np.linalg.inv(K)
    ldet1 = 2.0 * b_sz * d2h * float(np.sum(np.log(np.abs(np.diag(Kh)))))

    tril_r, tril_c = np.tril_indices(d_dim)
    vechI = np.eye(d_dim, dtype=np.float32)[tril_r, tril_c]
    consts = build_const_mats(t_dim, d2h, iK)
    consts["vechI"] = np.tile(vechI, t_dim).reshape(1, z_dim)
    consts["w_row"] = np.full((1, f_in), 1.0 / f_in, np.float32)

    dims = dict(b_sz=b_sz, x_dim=x_dim, h_dim=h_dim, t_dim=t_dim, d2h=d2h,
                z_dim=z_dim, nvt=nvt, f_in=f_in, f_out=f_out,
                sigma2=float(sigma2), ldet1=float(ldet1))

    key = jax.random.PRNGKey(0)
    params, key = init_params(key, x_dim, h_dim, t_dim, f_in, f_out, z_dim, nvt)
    params_np = {k: np.asarray(v, np.float32) for k, v in params.items()}

    key, ks, kt = jax.random.split(key, 3)
    s = jax.random.normal(ks, (b_sz, f_in), jnp.float32)        # inducing inputs
    t_ind = jax.random.normal(kt, (b_sz, f_out), jnp.float32)   # inducing outputs

    # K_ss^{-1}, K_ss^{-1} t and row norms of s hoisted out of the forward: they
    # depend only on the parameters (s, t) -> recompute once per optimizer step.
    # TODO(synk): dense Cholesky/inverse has no clean Pallas primitive; in training
    # redo this per step (e.g. jax.scipy cho_solve) outside the fused kernel.
    s64, t64 = np.asarray(s, np.float64), np.asarray(t_ind, np.float64)
    w64 = np.full((f_in,), 1.0 / f_in, np.float64)
    sw = s64 * w64
    s2_row = np.sum(sw * s64, axis=1)
    d2_ss = s2_row[:, None] + s2_row[None, :] - 2.0 * (sw @ s64.T)
    k_ss = sigma2 * np.exp(-0.5 * d2_ss) + 1e-5 * np.eye(b_sz)
    kss_inv64 = np.linalg.inv(k_ss)
    kinv_t64 = kss_inv64 @ t64
    s2cols = np.tile(s2_row[None, :], (b_sz, 1))

    packed, cfg = build_packed(
        params_np, consts,
        np.asarray(s64, np.float32), np.asarray(kss_inv64, np.float32),
        np.asarray(kinv_t64, np.float32), np.asarray(s2cols, np.float32), dims)

    key, kx, ke1, ke2, ke3 = jax.random.split(key, 5)
    x = jax.random.normal(kx, (b_sz, x_dim), jnp.float32)
    eps_xi = jax.random.normal(ke1, (b_sz, f_in), jnp.float32)
    eps_f = jax.random.normal(ke2, (b_sz, f_out), jnp.float32)
    eps_z = jax.random.normal(ke3, (b_sz, z_dim), jnp.float32)

    fwd = jax.jit(functools.partial(vgp_forward, cfg=cfg))
    kld, nll, (z_mean, z_covh), (x_mean, x_lcov) = fwd(packed, x, eps_xi, eps_f, eps_z)
    jax.block_until_ready((kld, nll, z_mean, z_covh, x_mean, x_lcov))

    # pure-JAX reference with the same bf16 cast points (sanity check)
    r_kld, r_nll, (r_zm, r_zc), (r_xm, r_xl) = ref_forward(
        params, s, t_ind, jnp.asarray(kss_inv64, jnp.float32),
        jnp.asarray(iK, jnp.float32), jnp.asarray(consts["w_row"]),
        jnp.asarray(consts["vechI"]), x, eps_xi, eps_f, eps_z, dims)

    assert np.isfinite(float(kld)) and np.isfinite(float(nll))
    np.testing.assert_allclose(float(kld), float(r_kld), rtol=1e-1, atol=1e-1)
    np.testing.assert_allclose(float(nll), float(r_nll), rtol=1e-1, atol=1e-1)
    np.testing.assert_allclose(np.asarray(z_mean), np.asarray(r_zm), rtol=1e-1, atol=5e-2)
    np.testing.assert_allclose(np.asarray(z_covh), np.asarray(r_zc), rtol=1e-1, atol=5e-2)
    np.testing.assert_allclose(np.asarray(x_mean), np.asarray(r_xm), rtol=1e-1, atol=5e-2)
    np.testing.assert_allclose(np.asarray(x_lcov), np.asarray(r_xl), rtol=1e-1, atol=5e-2)
    assert x_mean.shape == (b_sz, x_dim) and z_mean.shape == (b_sz, z_dim)
    assert z_covh.shape == (b_sz, nvt) and x_lcov.shape == (b_sz, x_dim)
    print("KERNEL_OK")
</pallas_src>

<mosaic_0001>
module attributes {stable_mosaic.version = 11 : i64} {
  func.func @_vgp_fused_kernel(%arg0: i32, %arg1: memref<8x640xf32, #tpu.memory_space<vmem>>, %arg2: memref<8x512xf32, #tpu.memory_space<vmem>>, %arg3: memref<240x32xbf16, #tpu.memory_space<vmem>>, %arg4: memref<32x1280xbf16, #tpu.memory_space<vmem>>, %arg5: memref<1x2176xf32, #tpu.memory_space<vmem>>, %arg6: memref<248x160xf32, #tpu.memory_space<vmem>>, %arg7: memref<8x768xf32, #tpu.memory_space<vmem>>) attributes {dimension_semantics = [#tpu.dimension_semantics<arbitrary>], iteration_bounds = array<i64: 1>, scalar_prefetch = 0 : i64, scratch_operands = 0 : i64, tpu.core_type = #tpu.core_type<tc>, window_params = [{pipeline_mode = #tpu.pipeline_mode<synchronous>, transform_indices = @transform_0, window_bounds = array<i64: 8, 640>}, {pipeline_mode = #tpu.pipeline_mode<synchronous>, transform_indices = @transform_1, window_bounds = array<i64: 8, 512>}, {pipeline_mode = #tpu.pipeline_mode<synchronous>, transform_indices = @transform_2, window_bounds = array<i64: 240, 32>}, {pipeline_mode = #tpu.pipeline_mode<synchronous>, transform_indices = @transform_3, window_bounds = array<i64: 32, 1280>}, {pipeline_mode = #tpu.pipeline_mode<synchronous>, transform_indices = @transform_4, window_bounds = array<i64: 1, 2176>}, {pipeline_mode = #tpu.pipeline_mode<synchronous>, transform_indices = @transform_5, window_bounds = array<i64: 248, 160>}, {pipeline_mode = #tpu.pipeline_mode<synchronous>, transform_indices = @transform_6, window_bounds = array<i64: 8, 768>}]} {
    %c0 = arith.constant 0 : index
    %c0_0 = arith.constant 0 : index
    %0 = vector.load %arg1[%c0, %c0_0] : memref<8x640xf32, #tpu.memory_space<vmem>>, vector<8x16xf32>
    %c0_1 = arith.constant 0 : index
    %c128 = arith.constant 128 : index
    %1 = vector.load %arg1[%c0_1, %c128] : memref<8x640xf32, #tpu.memory_space<vmem>>, vector<8x20xf32>
    %c0_2 = arith.constant 0 : index
    %c256 = arith.constant 256 : index
    %2 = vector.load %arg1[%c0_2, %c256] : memref<8x640xf32, #tpu.memory_space<vmem>>, vector<8x100xf32>
    %c0_3 = arith.constant 0 : index
    %c384 = arith.constant 384 : index
    %3 = vector.load %arg1[%c0_3, %c384] : memref<8x640xf32, #tpu.memory_space<vmem>>, vector<8x160xf32>
    %c0_4 = arith.constant 0 : index
    %c0_5 = arith.constant 0 : index
    %4 = vector.load %arg2[%c0_4, %c0_5] : memref<8x512xf32, #tpu.memory_space<vmem>>, vector<8x20xf32>
    %c0_6 = arith.constant 0 : index
    %c128_7 = arith.constant 128 : index
    %5 = vector.load %arg2[%c0_6, %c128_7] : memref<8x512xf32, #tpu.memory_space<vmem>>, vector<8x8xf32>
    %c0_8 = arith.constant 0 : index
    %c256_9 = arith.constant 256 : index
    %6 = vector.load %arg2[%c0_8, %c256_9] : memref<8x512xf32, #tpu.memory_space<vmem>>, vector<8x100xf32>
    %c0_10 = arith.constant 0 : index
    %c384_11 = arith.constant 384 : index
    %7 = vector.load %arg2[%c0_10, %c384_11] : memref<8x512xf32, #tpu.memory_space<vmem>>, vector<8x8xf32>
    %c0_12 = arith.constant 0 : index
    %c0_13 = arith.constant 0 : index
    %8 = vector.load %arg3[%c0_12, %c0_13] : memref<240x32xbf16, #tpu.memory_space<vmem>>, vector<16x32xbf16>
    %c16 = arith.constant 16 : index
    %c0_14 = arith.constant 0 : index
    %9 = vector.load %arg3[%c16, %c0_14] : memref<240x32xbf16, #tpu.memory_space<vmem>>, vector<100x32xbf16>
    %c128_15 = arith.constant 128 : index
    %c0_16 = arith.constant 0 : index
    %10 = vector.load %arg3[%c128_15, %c0_16] : memref<240x32xbf16, #tpu.memory_space<vmem>>, vector<16x32xbf16>
    %c144 = arith.constant 144 : index
    %c0_17 = arith.constant 0 : index
    %11 = vector.load %arg3[%c144, %c0_17] : memref<240x32xbf16, #tpu.memory_space<vmem>>, vector<40x32xbf16>
    %c192 = arith.constant 192 : index
    %c0_18 = arith.constant 0 : index
    %12 = vector.load %arg3[%c192, %c0_18] : memref<240x32xbf16, #tpu.memory_space<vmem>>, vector<40x32xbf16>
    %c0_19 = arith.constant 0 : index
    %c0_20 = arith.constant 0 : index
    %13 = vector.load %arg4[%c0_19, %c0_20] : memref<32x1280xbf16, #tpu.memory_space<vmem>>, vector<32x256xbf16>
    %c0_21 = arith.constant 0 : index
    %c256_22 = arith.constant 256 : index
    %14 = vector.load %arg4[%c0_21, %c256_22] : memref<32x1280xbf16, #tpu.memory_space<vmem>>, vector<32x256xbf16>
    %c0_23 = arith.constant 0 : index
    %c512 = arith.constant 512 : index
    %15 = vector.load %arg4[%c0_23, %c512] : memref<32x1280xbf16, #tpu.memory_space<vmem>>, vector<32x512xbf16>
    %c0_24 = arith.constant 0 : index
    %c1024 = arith.constant 1024 : index
    %16 = vector.load %arg4[%c0_24, %c1024] : memref<32x1280xbf16, #tpu.memory_space<vmem>>, vector<32x256xbf16>
    %c0_25 = arith.constant 0 : index
    %c0_26 = arith.constant 0 : index
    %17 = vector.load %arg5[%c0_25, %c0_26] : memref<1x2176xf32, #tpu.memory_space<vmem>>, vector<1x32xf32>
    %c0_27 = arith.constant 0 : index
    %c128_28 = arith.constant 128 : index
    %18 = vector.load %arg5[%c0_27, %c128_28] : memref<1x2176xf32, #tpu.memory_space<vmem>>, vector<1x32xf32>
    %c0_29 = arith.constant 0 : index
    %c256_30 = arith.constant 256 : index
    %19 = vector.load %arg5[%c0_29, %c256_30] : memref<1x2176xf32, #tpu.memory_space<vmem>>, vector<1x32xf32>
    %c0_31 = arith.constant 0 : index
    %c384_32 = arith.constant 384 : index
    %20 = vector.load %arg5[%c0_31, %c384_32] : memref<1x2176xf32, #tpu.memory_space<vmem>>, vector<1x32xf32>
    %c0_33 = arith.constant 0 : index
    %c512_34 = arith.constant 512 : index
    %21 = vector.load %arg5[%c0_33, %c512_34] : memref<1x2176xf32, #tpu.memory_space<vmem>>, vector<1x256xf32>
    %c0_35 = arith.constant 0 : index
    %c768 = arith.constant 768 : index
    %22 = vector.load %arg5[%c0_35, %c768] : memref<1x2176xf32, #tpu.memory_space<vmem>>, vector<1x256xf32>
    %c0_36 = arith.constant 0 : index
    %c1024_37 = arith.constant 1024 : index
    %23 = vector.load %arg5[%c0_36, %c1024_37] : memref<1x2176xf32, #tpu.memory_space<vmem>>, vector<1x512xf32>
    %c0_38 = arith.constant 0 : index
    %c1536 = arith.constant 1536 : index
    %24 = vector.load %arg5[%c0_38, %c1536] : memref<1x2176xf32, #tpu.memory_space<vmem>>, vector<1x256xf32>
    %c0_39 = arith.constant 0 : index
    %c1792 = arith.constant 1792 : index
    %25 = vector.load %arg5[%c0_39, %c1792] : memref<1x2176xf32, #tpu.memory_space<vmem>>, vector<1x20xf32>
    %c0_40 = arith.constant 0 : index
    %c1920 = arith.constant 1920 : index
    %26 = vector.load %arg5[%c0_40, %c1920] : memref<1x2176xf32, #tpu.memory_space<vmem>>, vector<1x40xf32>
    %c0_41 = arith.constant 0 : index
    %c2048 = arith.constant 2048 : index
    %27 = vector.load %arg5[%c0_41, %c2048] : memref<1x2176xf32, #tpu.memory_space<vmem>>, vector<1x10xf32>
    %c0_42 = arith.constant 0 : index
    %c0_43 = arith.constant 0 : index
    %28 = vector.load %arg6[%c0_42, %c0_43] : memref<248x160xf32, #tpu.memory_space<vmem>>, vector<10x160xf32>
    %c16_44 = arith.constant 16 : index
    %c0_45 = arith.constant 0 : index
    %29 = vector.load %arg6[%c16_44, %c0_45] : memref<248x160xf32, #tpu.memory_space<vmem>>, vector<160x40xf32>
    %c176 = arith.constant 176 : index
    %c0_46 = arith.constant 0 : index
    %30 = vector.load %arg6[%c176, %c0_46] : memref<248x160xf32, #tpu.memory_space<vmem>>, vector<10x16xf32>
    %c192_47 = arith.constant 192 : index
    %c0_48 = arith.constant 0 : index
    %31 = vector.load %arg6[%c192_47, %c0_48] : memref<248x160xf32, #tpu.memory_space<vmem>>, vector<16x16xf32>
    %c208 = arith.constant 208 : index
    %c0_49 = arith.constant 0 : index
    %32 = vector.load %arg6[%c208, %c0_49] : memref<248x160xf32, #tpu.memory_space<vmem>>, vector<40x40xf32>
    %33 = arith.truncf %0 : vector<8x16xf32> to vector<8x16xbf16>
    %cst = arith.constant dense<0.000000e+00> : vector<8x32xf32>
    %34 = tpu.matmul %33, %8, %cst {dimension_numbers = #tpu.dot_dimension_numbers<[1], [0], [0], [1], [0, 0, 1, 1], [], []>} : vector<8x16xbf16>, vector<16x32xbf16>, vector<8x32xf32> -> vector<8x32xf32>
    %35 = vector.broadcast %17 : vector<1x32xf32> to vector<8x32xf32>
    %36 = arith.addf %34, %35 : vector<8x32xf32>
    %cst_50 = arith.constant 0.000000e+00 : f32
    %37 = vector.broadcast %cst_50 : f32 to vector<8x32xf32>
    %38 = arith.maximumf %36, %37 : vector<8x32xf32>
    %39 = arith.truncf %38 : vector<8x32xf32> to vector<8x32xbf16>
    %cst_51 = arith.constant dense<0.000000e+00> : vector<8x256xf32>
    %40 = tpu.matmul %39, %13, %cst_51 {dimension_numbers = #tpu.dot_dimension_numbers<[1], [0], [0], [1], [0, 0, 1, 1], [], []>} : vector<8x32xbf16>, vector<32x256xbf16>, vector<8x256xf32> -> vector<8x256xf32>
    %41 = vector.broadcast %21 : vector<1x256xf32> to vector<8x256xf32>
    %42 = arith.addf %40, %41 : vector<8x256xf32>
    %43 = vector.extract_strided_slice %42 {offsets = [0, 0], sizes = [8, 20], strides = [1, 1]} : vector<8x256xf32> to vector<8x20xf32>
    %44 = vector.extract_strided_slice %42 {offsets = [0, 128], sizes = [8, 20], strides = [1, 1]} : vector<8x256xf32> to vector<8x20xf32>
    %cst_52 = arith.constant 5.000000e-01 : f32
    %45 = vector.broadcast %cst_52 : f32 to vector<8x20xf32>
    %46 = arith.mulf %45, %44 : vector<8x20xf32>
    %47 = math.exp %46 : vector<8x20xf32>
    %48 = arith.mulf %47, %1 : vector<8x20xf32>
    %49 = arith.addf %48, %43 : vector<8x20xf32>
    %50 = vector.broadcast %25 : vector<1x20xf32> to vector<8x20xf32>
    %51 = arith.mulf %49, %50 : vector<8x20xf32>
    %52 = arith.mulf %51, %49 : vector<8x20xf32>
    %cst_53 = arith.constant dense<0.000000e+00> : vector<8xf32>
    %53 = vector.multi_reduction <add>, %52, %cst_53 [1] : vector<8x20xf32> to vector<8xf32>
    %54 = vector.shape_cast %53 : vector<8xf32> to vector<8x1xf32>
    %cst_54 = arith.constant dense<0.000000e+00> : vector<8x8xf32>
    %55 = tpu.matmul %51, %4, %cst_54 {dimension_numbers = #tpu.dot_dimension_numbers<[1], [1], [0], [0], [0, 0, 1, 0], [], []>} : vector<8x20xf32>, vector<8x20xf32>, vector<8x8xf32> -> vector<8x8xf32>
    %56 = vector.broadcast %54 : vector<8x1xf32> to vector<8x8xf32>
    %57 = arith.addf %56, %7 : vector<8x8xf32>
    %cst_55 = arith.constant 2.000000e+00 : f32
    %58 = vector.broadcast %cst_55 : f32 to vector<8x8xf32>
    %59 = arith.mulf %58, %55 : vector<8x8xf32>
    %60 = arith.subf %57, %59 : vector<8x8xf32>
    %cst_56 = arith.constant -5.000000e-01 : f32
    %61 = vector.broadcast %cst_56 : f32 to vector<8x8xf32>
    %62 = arith.mulf %61, %60 : vector<8x8xf32>
    %63 = math.exp %62 : vector<8x8xf32>
    %cst_57 = arith.constant 1.000000e-01 : f32
    %64 = vector.broadcast %cst_57 : f32 to vector<8x8xf32>
    %65 = arith.mulf %64, %63 : vector<8x8xf32>
    %cst_58 = arith.constant dense<0.000000e+00> : vector<8x8xf32>
    %66 = tpu.matmul %65, %5, %cst_58 {dimension_numbers = #tpu.dot_dimension_numbers<[1], [0], [0], [1], [0, 0, 1, 1], [], []>} : vector<8x8xf32>, vector<8x8xf32>, vector<8x8xf32> -> vector<8x8xf32>
    %cst_59 = arith.constant dense<0.000000e+00> : vector<8x100xf32>
    %67 = tpu.matmul %65, %6, %cst_59 {dimension_numbers = #tpu.dot_dimension_numbers<[1], [0], [0], [1], [0, 0, 1, 1], [], []>} : vector<8x8xf32>, vector<8x100xf32>, vector<8x100xf32> -> vector<8x100xf32>
    %68 = arith.mulf %66, %65 : vector<8x8xf32>
    %cst_60 = arith.constant dense<0.000000e+00> : vector<8xf32>
    %69 = vector.multi_reduction <add>, %68, %cst_60 [1] : vector<8x8xf32> to vector<8xf32>
    %70 = vector.shape_cast %69 : vector<8xf32> to vector<8x1xf32>
    %cst_61 = arith.constant 1.000000e-01 : f32
    %71 = vector.broadcast %cst_61 : f32 to vector<8x1xf32>
    %72 = arith.subf %71, %70 : vector<8x1xf32>
    %cst_62 = arith.constant 9.99999993E-9 : f32
    %73 = vector.broadcast %cst_62 : f32 to vector<8x1xf32>
    %74 = arith.maximumf %72, %73 : vector<8x1xf32>
    %75 = math.sqrt %74 : vector<8x1xf32>
    %76 = vector.broadcast %75 : vector<8x1xf32> to vector<8x100xf32>
    %77 = arith.mulf %76, %2 : vector<8x100xf32>
    %78 = arith.addf %77, %67 : vector<8x100xf32>
    %79 = arith.truncf %78 : vector<8x100xf32> to vector<8x100xbf16>
    %cst_63 = arith.constant dense<0.000000e+00> : vector<8x32xf32>
    %80 = tpu.matmul %79, %9, %cst_63 {dimension_numbers = #tpu.dot_dimension_numbers<[1], [0], [0], [1], [0, 0, 1, 1], [], []>} : vector<8x100xbf16>, vector<100x32xbf16>, vector<8x32xf32> -> vector<8x32xf32>
    %81 = vector.broadcast %18 : vector<1x32xf32> to vector<8x32xf32>
    %82 = arith.addf %80, %81 : vector<8x32xf32>
    %cst_64 = arith.constant 0.000000e+00 : f32
    %83 = vector.broadcast %cst_64 : f32 to vector<8x32xf32>
    %84 = arith.maximumf %82, %83 : vector<8x32xf32>
    %85 = arith.truncf %84 : vector<8x32xf32> to vector<8x32xbf16>
    %cst_65 = arith.constant dense<0.000000e+00> : vector<8x256xf32>
    %86 = tpu.matmul %85, %14, %cst_65 {dimension_numbers = #tpu.dot_dimension_numbers<[1], [0], [0], [1], [0, 0, 1, 1], [], []>} : vector<8x32xbf16>, vector<32x256xbf16>, vector<8x256xf32> -> vector<8x256xf32>
    %87 = vector.broadcast %22 : vector<1x256xf32> to vector<8x256xf32>
    %88 = arith.addf %86, %87 : vector<8x256xf32>
    %89 = vector.extract_strided_slice %88 {offsets = [0, 0], sizes = [8, 40], strides = [1, 1]} : vector<8x256xf32> to vector<8x40xf32>
    %90 = vector.extract_strided_slice %88 {offsets = [0, 128], sizes = [8, 10], strides = [1, 1]} : vector<8x256xf32> to vector<8x10xf32>
    %c0_66 = arith.constant 0 : index
    %c0_67 = arith.constant 0 : index
    %91 = vector.load %arg7[%c0_66, %c0_67] : memref<8x768xf32, #tpu.memory_space<vmem>>, vector<8x256xf32>
    tpu.vector_store %arg7[%c0_66, %c0_67], %88 {strides = array<i32>} : memref<8x768xf32, #tpu.memory_space<vmem>>, vector<8x256xf32>,
    %cst_68 = arith.constant dense<0.000000e+00> : vector<8x160xf32>
    %92 = tpu.matmul %90, %28, %cst_68 {dimension_numbers = #tpu.dot_dimension_numbers<[1], [0], [0], [1], [0, 0, 1, 1], [], []>} : vector<8x10xf32>, vector<10x160xf32>, vector<8x160xf32> -> vector<8x160xf32>
    %93 = arith.mulf %92, %3 : vector<8x160xf32>
    %cst_69 = arith.constant dense<0.000000e+00> : vector<8x40xf32>
    %94 = tpu.matmul %93, %29, %cst_69 {dimension_numbers = #tpu.dot_dimension_numbers<[1], [0], [0], [1], [0, 0, 1, 1], [], []>} : vector<8x160xf32>, vector<160x40xf32>, vector<8x40xf32> -> vector<8x40xf32>
    %95 = arith.addf %89, %94 : vector<8x40xf32>
    %96 = arith.truncf %0 : vector<8x16xf32> to vector<8x16xbf16>
    %cst_70 = arith.constant dense<0.000000e+00> : vector<8x32xf32>
    %97 = tpu.matmul %96, %10, %cst_70 {dimension_numbers = #tpu.dot_dimension_numbers<[1], [0], [0], [1], [0, 0, 1, 1], [], []>} : vector<8x16xbf16>, vector<16x32xbf16>, vector<8x32xf32> -> vector<8x32xf32>
    %98 = arith.truncf %95 : vector<8x40xf32> to vector<8x40xbf16>
    %cst_71 = arith.constant dense<0.000000e+00> : vector<8x32xf32>
    %99 = tpu.matmul %98, %11, %cst_71 {dimension_numbers = #tpu.dot_dimension_numbers<[1], [0], [0], [1], [0, 0, 1, 1], [], []>} : vector<8x40xbf16>, vector<40x32xbf16>, vector<8x32xf32> -> vector<8x32xf32>
    %100 = arith.addf %97, %99 : vector<8x32xf32>
    %101 = vector.broadcast %19 : vector<1x32xf32> to vector<8x32xf32>
    %102 = arith.addf %100, %101 : vector<8x32xf32>
    %cst_72 = arith.constant 0.000000e+00 : f32
    %103 = vector.broadcast %cst_72 : f32 to vector<8x32xf32>
    %104 = arith.maximumf %102, %103 : vector<8x32xf32>
    %105 = arith.truncf %104 : vector<8x32xf32> to vector<8x32xbf16>
    %cst_73 = arith.constant dense<0.000000e+00> : vector<8x512xf32>
    %106 = tpu.matmul %105, %15, %cst_73 {dimension_numbers = #tpu.dot_dimension_numbers<[1], [0], [0], [1], [0, 0, 1, 1], [], []>} : vector<8x32xbf16>, vector<32x512xbf16>, vector<8x512xf32> -> vector<8x512xf32>
    %107 = vector.broadcast %23 : vector<1x512xf32> to vector<8x512xf32>
    %108 = arith.addf %106, %107 : vector<8x512xf32>
    %109 = vector.extract_strided_slice %108 {offsets = [0, 0], sizes = [8, 20], strides = [1, 1]} : vector<8x512xf32> to vector<8x20xf32>
    %110 = vector.extract_strided_slice %108 {offsets = [0, 128], sizes = [8, 100], strides = [1, 1]} : vector<8x512xf32> to vector<8x100xf32>
    %111 = vector.extract_strided_slice %108 {offsets = [0, 256], sizes = [8, 20], strides = [1, 1]} : vector<8x512xf32> to vector<8x20xf32>
    %112 = vector.extract_strided_slice %108 {offsets = [0, 384], sizes = [8, 100], strides = [1, 1]} : vector<8x512xf32> to vector<8x100xf32>
    %113 = arith.truncf %95 : vector<8x40xf32> to vector<8x40xbf16>
    %cst_74 = arith.constant dense<0.000000e+00> : vector<8x32xf32>
    %114 = tpu.matmul %113, %12, %cst_74 {dimension_numbers = #tpu.dot_dimension_numbers<[1], [0], [0], [1], [0, 0, 1, 1], [], []>} : vector<8x40xbf16>, vector<40x32xbf16>, vector<8x32xf32> -> vector<8x32xf32>
    %115 = vector.broadcast %20 : vector<1x32xf32> to vector<8x32xf32>
    %116 = arith.addf %114, %115 : vector<8x32xf32>
    %cst_75 = arith.constant 0.000000e+00 : f32
    %117 = vector.broadcast %cst_75 : f32 to vector<8x32xf32>
    %118 = arith.maximumf %116, %117 : vector<8x32xf32>
    %119 = arith.truncf %118 : vector<8x32xf32> to vector<8x32xbf16>
    %cst_76 = arith.constant dense<0.000000e+00> : vector<8x256xf32>
    %120 = tpu.matmul %119, %16, %cst_76 {dimension_numbers = #tpu.dot_dimension_numbers<[1], [0], [0], [1], [0, 0, 1, 1], [], []>} : vector<8x32xbf16>, vector<32x256xbf16>, vector<8x256xf32> -> vector<8x256xf32>
    %121 = vector.broadcast %24 : vector<1x256xf32> to vector<8x256xf32>
    %122 = arith.addf %120, %121 : vector<8x256xf32>
    %123 = vector.extract_strided_slice %122 {offsets = [0, 0], sizes = [8, 16], strides = [1, 1]} : vector<8x256xf32> to vector<8x16xf32>
    %124 = vector.extract_strided_slice %122 {offsets = [0, 128], sizes = [8, 16], strides = [1, 1]} : vector<8x256xf32> to vector<8x16xf32>
    %c0_77 = arith.constant 0 : index
    %c256_78 = arith.constant 256 : index
    %125 = vector.load %arg7[%c0_77, %c256_78] : memref<8x768xf32, #tpu.memory_space<vmem>>, vector<8x256xf32>
    tpu.vector_store %arg7[%c0_77, %c256_78], %122 {strides = array<i32>} : memref<8x768xf32, #tpu.memory_space<vmem>>, vector<8x256xf32>,
    %cst_79 = arith.constant dense<0.000000e+00> : vector<8x16xf32>
    %126 = tpu.matmul %90, %30, %cst_79 {dimension_numbers = #tpu.dot_dimension_numbers<[1], [0], [0], [1], [0, 0, 1, 1], [], []>} : vector<8x10xf32>, vector<10x16xf32>, vector<8x16xf32> -> vector<8x16xf32>
    %cst_80 = arith.constant dense<0.000000e+00> : vector<8x16xf32>
    %127 = tpu.matmul %126, %31, %cst_80 {dimension_numbers = #tpu.dot_dimension_numbers<[1], [0], [0], [1], [0, 0, 1, 1], [], []>} : vector<8x16xf32>, vector<16x16xf32>, vector<8x16xf32> -> vector<8x16xf32>
    %128 = arith.mulf %127, %126 : vector<8x16xf32>
    %129 = vector.shape_cast %128 : vector<8x16xf32> to vector<1x8x16xf32>
    %cst_81 = arith.constant dense<0.000000e+00> : vector<1xf32>
    %130 = vector.multi_reduction <add>, %129, %cst_81 [1, 2] : vector<1x8x16xf32> to vector<1xf32>
    %131 = vector.shape_cast %130 : vector<1xf32> to vector<1x1x1xf32>
    %132 = vector.extract %131[0, 0, 0] : f32 from vector<1x1x1xf32>
    %133 = vector.broadcast %132 : f32 to vector<1x1xf32>
    %cst_82 = arith.constant 1.000000e+01 : f32
    %134 = vector.broadcast %cst_82 : f32 to vector<1x1xf32>
    %135 = arith.mulf %134, %133 : vector<1x1xf32>
    %136 = vector.broadcast %26 : vector<1x40xf32> to vector<8x40xf32>
    %137 = arith.subf %136, %89 : vector<8x40xf32>
    %cst_83 = arith.constant dense<0.000000e+00> : vector<8x40xf32>
    %138 = tpu.matmul %137, %32, %cst_83 {dimension_numbers = #tpu.dot_dimension_numbers<[1], [0], [0], [1], [0, 0, 1, 1], [], []>} : vector<8x40xf32>, vector<40x40xf32>, vector<8x40xf32> -> vector<8x40xf32>
    %139 = arith.mulf %138, %137 : vector<8x40xf32>
    %140 = vector.shape_cast %139 : vector<8x40xf32> to vector<1x8x40xf32>
    %cst_84 = arith.constant dense<0.000000e+00> : vector<1xf32>
    %141 = vector.multi_reduction <add>, %140, %cst_84 [1, 2] : vector<1x8x40xf32> to vector<1xf32>
    %142 = vector.shape_cast %141 : vector<1xf32> to vector<1x1x1xf32>
    %143 = vector.extract %142[0, 0, 0] : f32 from vector<1x1x1xf32>
    %144 = vector.broadcast %143 : f32 to vector<1x1xf32>
    %cst_85 = arith.constant 5.000000e-01 : f32
    %145 = vector.broadcast %cst_85 : f32 to vector<1x10xf32>
    %146 = arith.cmpf ogt, %27, %145 : vector<1x10xf32>
    %147 = math.absf %90 : vector<8x10xf32>
    %cst_86 = arith.constant 9.99999993E-9 : f32
    %148 = vector.broadcast %cst_86 : f32 to vector<8x10xf32>
    %149 = arith.maximumf %147, %148 : vector<8x10xf32>
    %cst_87 = arith.constant 1.000000e+00 : f32
    %150 = vector.shape_cast %146 : vector<1x10xi1> to vector<1x10xi1>
    %151 = vector.broadcast %150 : vector<1x10xi1> to vector<8x10xi1>
    %152 = vector.broadcast %cst_87 : f32 to vector<8x10xf32>
    %153 = arith.select %151, %149, %152 : vector<8x10xi1>, vector<8x10xf32>
    %154 = math.log %153 : vector<8x10xf32>
    %155 = vector.shape_cast %154 : vector<8x10xf32> to vector<1x8x10xf32>
    %cst_88 = arith.constant dense<0.000000e+00> : vector<1xf32>
    %156 = vector.multi_reduction <add>, %155, %cst_88 [1, 2] : vector<1x8x10xf32> to vector<1xf32>
    %157 = vector.shape_cast %156 : vector<1xf32> to vector<1x1x1xf32>
    %158 = vector.extract %157[0, 0, 0] : f32 from vector<1x1x1xf32>
    %159 = vector.broadcast %158 : f32 to vector<1x1xf32>
    %cst_89 = arith.constant 2.000000e+01 : f32
    %160 = vector.broadcast %cst_89 : f32 to vector<1x1xf32>
    %161 = arith.mulf %160, %159 : vector<1x1xf32>
    %162 = arith.addf %135, %144 : vector<1x1xf32>
    %cst_90 = arith.constant 3.200000e+02 : f32
    %163 = vector.broadcast %cst_90 : f32 to vector<1x1xf32>
    %164 = arith.subf %162, %163 : vector<1x1xf32>
    %cst_91 = arith.constant -834.59552 : f32
    %165 = vector.broadcast %cst_91 : f32 to vector<1x1xf32>
    %166 = arith.addf %164, %165 : vector<1x1xf32>
    %167 = arith.subf %166, %161 : vector<1x1xf32>
    %cst_92 = arith.constant 5.000000e-01 : f32
    %168 = vector.broadcast %cst_92 : f32 to vector<1x1xf32>
    %169 = arith.mulf %168, %167 : vector<1x1xf32>
    %cst_93 = arith.constant 8.000000e+00 : f32
    %170 = vector.broadcast %cst_93 : f32 to vector<1x1xf32>
    %171 = arith.divf %169, %170 : vector<1x1xf32>
    %172 = math.log %74 : vector<8x1xf32>
    %cst_94 = arith.constant 0.000000e+00 : f32
    %173 = vector.broadcast %cst_94 : f32 to vector<8x100xf32>
    %174 = arith.subf %173, %112 : vector<8x100xf32>
    %175 = math.exp %174 : vector<8x100xf32>
    %176 = arith.subf %67, %110 : vector<8x100xf32>
    %177 = vector.broadcast %172 : vector<8x1xf32> to vector<8x100xf32>
    %178 = arith.subf %112, %177 : vector<8x100xf32>
    %cst_95 = arith.constant 1.000000e+00 : f32
    %179 = vector.broadcast %cst_95 : f32 to vector<8x100xf32>
    %180 = arith.subf %178, %179 : vector<8x100xf32>
    %181 = vector.broadcast %74 : vector<8x1xf32> to vector<8x100xf32>
    %182 = arith.mulf %175, %181 : vector<8x100xf32>
    %183 = arith.addf %180, %182 : vector<8x100xf32>
    %184 = arith.mulf %176, %176 : vector<8x100xf32>
    %185 = arith.mulf %184, %175 : vector<8x100xf32>
    %186 = arith.addf %183, %185 : vector<8x100xf32>
    %187 = vector.shape_cast %186 : vector<8x100xf32> to vector<1x8x100xf32>
    %cst_96 = arith.constant dense<0.000000e+00> : vector<1xf32>
    %188 = vector.multi_reduction <add>, %187, %cst_96 [1, 2] : vector<1x8x100xf32> to vector<1xf32>
    %189 = vector.shape_cast %188 : vector<1xf32> to vector<1x1x1xf32>
    %190 = vector.extract %189[0, 0, 0] : f32 from vector<1x1x1xf32>
    %191 = vector.broadcast %190 : f32 to vector<1x1xf32>
    %cst_97 = arith.constant 5.000000e-01 : f32
    %192 = vector.broadcast %cst_97 : f32 to vector<1x1xf32>
    %193 = arith.mulf %192, %191 : vector<1x1xf32>
    %cst_98 = arith.constant 8.000000e+00 : f32
    %194 = vector.broadcast %cst_98 : f32 to vector<1x1xf32>
    %195 = arith.divf %193, %194 : vector<1x1xf32>
    %196 = arith.subf %0, %123 : vector<8x16xf32>
    %cst_99 = arith.constant 0.000000e+00 : f32
    %197 = vector.broadcast %cst_99 : f32 to vector<8x16xf32>
    %198 = arith.subf %197, %124 : vector<8x16xf32>
    %199 = math.exp %198 : vector<8x16xf32>
    %200 = arith.mulf %199, %196 : vector<8x16xf32>
    %201 = arith.mulf %200, %196 : vector<8x16xf32>
    %202 = arith.addf %124, %201 : vector<8x16xf32>
    %cst_100 = arith.constant 1.83787704 : f32
    %203 = vector.broadcast %cst_100 : f32 to vector<8x16xf32>
    %204 = arith.addf %202, %203 : vector<8x16xf32>
    %205 = vector.shape_cast %204 : vector<8x16xf32> to vector<1x8x16xf32>
    %cst_101 = arith.constant dense<0.000000e+00> : vector<1xf32>
    %206 = vector.multi_reduction <add>, %205, %cst_101 [1, 2] : vector<1x8x16xf32> to vector<1xf32>
    %207 = vector.shape_cast %206 : vector<1xf32> to vector<1x1x1xf32>
    %208 = vector.extract %207[0, 0, 0] : f32 from vector<1x1x1xf32>
    %209 = vector.broadcast %208 : f32 to vector<1x1xf32>
    %cst_102 = arith.constant 5.000000e-01 : f32
    %210 = vector.broadcast %cst_102 : f32 to vector<1x1xf32>
    %211 = arith.mulf %210, %209 : vector<1x1xf32>
    %cst_103 = arith.constant 8.000000e+00 : f32
    %212 = vector.broadcast %cst_103 : f32 to vector<1x1xf32>
    %213 = arith.divf %211, %212 : vector<1x1xf32>
    %214 = arith.subf %49, %43 : vector<8x20xf32>
    %cst_104 = arith.constant 0.000000e+00 : f32
    %215 = vector.broadcast %cst_104 : f32 to vector<8x20xf32>
    %216 = arith.subf %215, %44 : vector<8x20xf32>
    %217 = math.exp %216 : vector<8x20xf32>
    %218 = arith.mulf %217, %214 : vector<8x20xf32>
    %219 = arith.mulf %218, %214 : vector<8x20xf32>
    %220 = arith.addf %44, %219 : vector<8x20xf32>
    %cst_105 = arith.constant 1.83787704 : f32
    %221 = vector.broadcast %cst_105 : f32 to vector<8x20xf32>
    %222 = arith.addf %220, %221 : vector<8x20xf32>
    %223 = vector.shape_cast %222 : vector<8x20xf32> to vector<1x8x20xf32>
    %cst_106 = arith.constant dense<0.000000e+00> : vector<1xf32>
    %224 = vector.multi_reduction <add>, %223, %cst_106 [1, 2] : vector<1x8x20xf32> to vector<1xf32>
    %225 = vector.shape_cast %224 : vector<1xf32> to vector<1x1x1xf32>
    %226 = vector.extract %225[0, 0, 0] : f32 from vector<1x1x1xf32>
    %227 = vector.broadcast %226 : f32 to vector<1x1xf32>
    %cst_107 = arith.constant 5.000000e-01 : f32
    %228 = vector.broadcast %cst_107 : f32 to vector<1x1xf32>
    %229 = arith.mulf %228, %227 : vector<1x1xf32>
    %cst_108 = arith.constant 8.000000e+00 : f32
    %230 = vector.broadcast %cst_108 : f32 to vector<1x1xf32>
    %231 = arith.divf %229, %230 : vector<1x1xf32>
    %232 = arith.subf %213, %231 : vector<1x1xf32>
    %233 = arith.subf %49, %109 : vector<8x20xf32>
    %cst_109 = arith.constant 0.000000e+00 : f32
    %234 = vector.broadcast %cst_109 : f32 to vector<8x20xf32>
    %235 = arith.subf %234, %111 : vector<8x20xf32>
    %236 = math.exp %235 : vector<8x20xf32>
    %237 = arith.mulf %236, %233 : vector<8x20xf32>
    %238 = arith.mulf %237, %233 : vector<8x20xf32>
    %239 = arith.addf %111, %238 : vector<8x20xf32>
    %cst_110 = arith.constant 1.83787704 : f32
    %240 = vector.broadcast %cst_110 : f32 to vector<8x20xf32>
    %241 = arith.addf %239, %240 : vector<8x20xf32>
    %242 = vector.shape_cast %241 : vector<8x20xf32> to vector<1x8x20xf32>
    %cst_111 = arith.constant dense<0.000000e+00> : vector<1xf32>
    %243 = vector.multi_reduction <add>, %242, %cst_111 [1, 2] : vector<1x8x20xf32> to vector<1xf32>
    %244 = vector.shape_cast %243 : vector<1xf32> to vector<1x1x1xf32>
    %245 = vector.extract %244[0, 0, 0] : f32 from vector<1x1x1xf32>
    %246 = vector.broadcast %245 : f32 to vector<1x1xf32>
    %cst_112 = arith.constant 5.000000e-01 : f32
    %247 = vector.broadcast %cst_112 : f32 to vector<1x1xf32>
    %248 = arith.mulf %247, %246 : vector<1x1xf32>
    %cst_113 = arith.constant 8.000000e+00 : f32
    %249 = vector.broadcast %cst_113 : f32 to vector<1x1xf32>
    %250 = arith.divf %248, %249 : vector<1x1xf32>
    %251 = arith.addf %232, %250 : vector<1x1xf32>
    %252 = arith.addf %171, %195 : vector<1x1xf32>
    %253 = vector.shape_cast %252 : vector<1x1xf32> to vector<1x1xf32>
    %254 = vector.broadcast %253 : vector<1x1xf32> to vector<8x128xf32>
    %c0_114 = arith.constant 0 : index
    %c512_115 = arith.constant 512 : index
    %255 = vector.load %arg7[%c0_114, %c512_115] : memref<8x768xf32, #tpu.memory_space<vmem>>, vector<8x128xf32>
    tpu.vector_store %arg7[%c0_114, %c512_115], %254 {strides = array<i32>} : memref<8x768xf32, #tpu.memory_space<vmem>>, vector<8x128xf32>,
    %256 = vector.shape_cast %251 : vector<1x1xf32> to vector<1x1xf32>
    %257 = vector.broadcast %256 : vector<1x1xf32> to vector<8x128xf32>
    %c0_116 = arith.constant 0 : index
    %c640 = arith.constant 640 : index
    %258 = vector.load %arg7[%c0_116, %c640] : memref<8x768xf32, #tpu.memory_space<vmem>>, vector<8x128xf32>
    tpu.vector_store %arg7[%c0_116, %c640], %257 {strides = array<i32>} : memref<8x768xf32, #tpu.memory_space<vmem>>, vector<8x128xf32>,
    return
  }
  func.func @transform_0(%arg0: i32) -> (i32, i32) {
    %c0_i32 = arith.constant 0 : i32
    %c0_i32_0 = arith.constant 0 : i32
    %c0_i32_1 = arith.constant 0 : i32
    return %c0_i32, %c0_i32_0 : i32, i32
  }
  func.func @transform_1(%arg0: i32) -> (i32, i32) {
    %c0_i32 = arith.constant 0 : i32
    %c0_i32_0 = arith.constant 0 : i32
    %c0_i32_1 = arith.constant 0 : i32
    return %c0_i32, %c0_i32_0 : i32, i32
  }
  func.func @transform_2(%arg0: i32) -> (i32, i32) {
    %c0_i32 = arith.constant 0 : i32
    %c0_i32_0 = arith.constant 0 : i32
    %c0_i32_1 = arith.constant 0 : i32
    return %c0_i32, %c0_i32_0 : i32, i32
  }
  func.func @transform_3(%arg0: i32) -> (i32, i32) {
    %c0_i32 = arith.constant 0 : i32
    %c0_i32_0 = arith.constant 0 : i32
    %c0_i32_1 = arith.constant 0 : i32
    return %c0_i32, %c0_i32_0 : i32, i32
  }
  func.func @transform_4(%arg0: i32) -> (i32, i32) {
    %c0_i32 = arith.constant 0 : i32
    %c0_i32_0 = arith.constant 0 : i32
    %c0_i32_1 = arith.constant 0 : i32
    return %c0_i32, %c0_i32_0 : i32, i32
  }
  func.func @transform_5(%arg0: i32) -> (i32, i32) {
    %c0_i32 = arith.constant 0 : i32
    %c0_i32_0 = arith.constant 0 : i32
    %c0_i32_1 = arith.constant 0 : i32
    return %c0_i32, %c0_i32_0 : i32, i32
  }
  func.func @transform_6(%arg0: i32) -> (i32, i32) {
    %c0_i32 = arith.constant 0 : i32
    %c0_i32_0 = arith.constant 0 : i32
    %c0_i32_1 = arith.constant 0 : i32
    return %c0_i32, %c0_i32_0 : i32, i32
  }
}

</mosaic_0001>

<llo_original>
// kernel: vgp_forward.1
$region0: #{vgp_forward.1}
  #allocation0 [shape = 'u32[]', space=smem, size = 0x4, offset = 0x4, fixed_abs, tag = 'smem constant byte address 0x4 - core index']
  #allocation1 [shape = 'u32[144,128]{1,0:T(1,128)}', space=vmem, size = 0x12000, scoped, tag = 'internal scratch']
  %s0 = inlined_call_operand.vmem [shape: f32[8,640], index: 0, kind: input, shape index: {}]
  %s1 = inlined_call_operand.vmem [shape: f32[8,512], index: 1, kind: input, shape index: {}]
  %s2 = inlined_call_operand.vmem [shape: bf16[240,32], index: 2, kind: input, shape index: {}]
  %s3 = inlined_call_operand.vmem [shape: bf16[32,1280], index: 3, kind: input, shape index: {}]
  %s4 = inlined_call_operand.vmem [shape: f32[1,2176], index: 4, kind: input, shape index: {}]
  %s5 = inlined_call_operand.vmem [shape: f32[248,160], index: 5, kind: input, shape index: {}]
  %s6 = inlined_call_operand.vmem [shape: f32[8,768], index: 6, kind: output, shape index: {}]
  %s7 = sld [smem:[#allocation0]]
  $region34: #{vgp_forward.1} parent=0
    _
  %s9 = ssub.s32 1, %s7
  %s10 = scalar_select 0, %s9, %s7
  // Predicated region
  $region2: #{vgp_forward.1} parent=0 // pred_check
    _
  $region3: #{vgp_forward.1} parent=0 // pred_check_branch
    %12 = sbr.rel (0) target = $region5
  $region4: #{vgp_forward.1} parent=0 // pred_region
    _
  $region5: #{vgp_forward.1} parent=0 // pred_fallthru
    _
  // Predicated region
  $region6: #{vgp_forward.1} parent=0 // pred_check
    _
  $region7: #{vgp_forward.1} parent=0 // pred_check_branch
    %14 = sbr.rel (0) target = $region9
  $region8: #{vgp_forward.1} parent=0 // pred_region
    _
  $region9: #{vgp_forward.1} parent=0 // pred_fallthru
    _
  // Predicated region
  $region10: #{vgp_forward.1} parent=0 // pred_check
    _
  $region11: #{vgp_forward.1} parent=0 // pred_check_branch
    %16 = sbr.rel (0) target = $region13
  $region12: #{vgp_forward.1} parent=0 // pred_region
    _
  $region13: #{vgp_forward.1} parent=0 // pred_fallthru
    _
  // Predicated region
  $region14: #{vgp_forward.1} parent=0 // pred_check
    _
  $region15: #{vgp_forward.1} parent=0 // pred_check_branch
    %18 = sbr.rel (0) target = $region17
  $region16: #{vgp_forward.1} parent=0 // pred_region
    _
  $region17: #{vgp_forward.1} parent=0 // pred_fallthru
    _
  // Predicated region
  $region18: #{vgp_forward.1} parent=0 // pred_check
    _
  $region19: #{vgp_forward.1} parent=0 // pred_check_branch
    %20 = sbr.rel (0) target = $region21
  $region20: #{vgp_forward.1} parent=0 // pred_region
    _
  $region21: #{vgp_forward.1} parent=0 // pred_fallthru
    _
  // Predicated region
  $region22: #{vgp_forward.1} parent=0 // pred_check
    _
  $region23: #{vgp_forward.1} parent=0 // pred_check_branch
    %22 = sbr.rel (0) target = $region25
  $region24: #{vgp_forward.1} parent=0 // pred_region
    _
  $region25: #{vgp_forward.1} parent=0 // pred_fallthru
    _
  %v24 = vld [vmem:[%s0] sm:$0xff]
  %v25 = vld [vmem:[%s0 + $0x8] sm:$0xff]
  %v26 = vld [vmem:[%s0 + $0x10] sm:$0xff]
  %v27 = vld [vmem:[%s0 + $0x18] sm:$0xff]
  %v28 = vld [vmem:[%s0 + $0x20] sm:$0xff]
  %v29 = vld [vmem:[%s1] sm:$0xff]
  %v30 = vld [vmem:[%s1 + $0x8] sm:$0xff]
  %v31 = vld [vmem:[%s1 + $0x10] sm:$0xff]
  %v32 = vld [vmem:[%s1 + $0x18] sm:$0xff]
  %v33 = vld [vmem:[%s2] sm:$0xf]
  %v34 = vld [vmem:[%s2 + $0x4] sm:$0xf]
  %v35 = vld [vmem:[%s2 + $0x8] sm:$0xf]
  %v36 = vld [vmem:[%s2 + $0xc] sm:$0xf]
  %v37 = vld [vmem:[%s2 + $0x10] sm:$0xf]
  %v38 = vld [vmem:[%s2 + $0x14] sm:$0xf]
  %v39 = vld [vmem:[%s2 + $0x18] sm:$0xf]
  %v40 = vld [vmem:[%s2 + $0x1c] sm:$0xf]
  %v41 = vld [vmem:[%s2 + $0x20] sm:$0xf]
  %v42 = vld [vmem:[%s2 + $0x24] sm:$0xf]
  %v43 = vld [vmem:[%s2 + $0x28] sm:$0xf]
  %v44 = vld [vmem:[%s2 + $0x2c] sm:$0xf]
  %v45 = vld [vmem:[%s2 + $0x30] sm:$0xf]
  %v46 = vld [vmem:[%s2 + $0x34] sm:$0xf]
  %v47 = vld [vmem:[%s2 + $0x38] sm:$0x3]
  %v48 = vld [vmem:[%s2 + $0x40] sm:$0xf]
  %v49 = vld [vmem:[%s2 + $0x44] sm:$0xf]
  %v50 = vld [vmem:[%s2 + $0x48] sm:$0xf]
  %v51 = vld [vmem:[%s2 + $0x4c] sm:$0xf]
  %v52 = vld [vmem:[%s2 + $0x50] sm:$0xf]
  %v53 = vld [vmem:[%s2 + $0x54] sm:$0xf]
  %v54 = vld [vmem:[%s2 + $0x58] sm:$0xf]
  %v55 = vld [vmem:[%s2 + $0x60] sm:$0xf]
  %v56 = vld [vmem:[%s2 + $0x64] sm:$0xf]
  %v57 = vld [vmem:[%s2 + $0x68] sm:$0xf]
  %v58 = vld [vmem:[%s2 + $0x6c] sm:$0xf]
  %v59 = vld [vmem:[%s2 + $0x70] sm:$0xf]
  %v60 = vld [vmem:[%s3] sm:$0xff]
  %v61 = vld [vmem:[%s3 + $0x28] sm:$0xff]
  %v62 = vld [vmem:[%s3 + $0x50] sm:$0xff]
  %v63 = vld [vmem:[%s3 + $0x78] sm:$0xff]
  %v64 = vld [vmem:[%s3 + $0x8] sm:$0xff]
  %v65 = vld [vmem:[%s3 + $0x30] sm:$0xff]
  %v66 = vld [vmem:[%s3 + $0x58] sm:$0xff]
  %v67 = vld [vmem:[%s3 + $0x80] sm:$0xff]
  %v68 = vld [vmem:[%s3 + $0x10] sm:$0xff]
  %v69 = vld [vmem:[%s3 + $0x18] sm:$0xff]
  %v70 = vld [vmem:[%s3 + $0x38] sm:$0xff]
  %v71 = vld [vmem:[%s3 + $0x40] sm:$0xff]
  %v72 = vld [vmem:[%s3 + $0x60] sm:$0xff]
  %v73 = vld [vmem:[%s3 + $0x68] sm:$0xff]
  %v74 = vld [vmem:[%s3 + $0x88] sm:$0xff]
  %v75 = vld [vmem:[%s3 + $0x90] sm:$0xff]
  %v76 = vld [vmem:[%s3 + $0x20] sm:$0xff]
  %v77 = vld [vmem:[%s3 + $0x48] sm:$0xff]
  %v78 = vld [vmem:[%s3 + $0x70] sm:$0xff]
  %v79 = vld [vmem:[%s3 + $0x98] sm:$0xff]
  %v80 = vld [vmem:[%s4] sm:$0x1]
  %v81 = vld [vmem:[%s4 + $0x1] sm:$0x1]
  %v82 = vld [vmem:[%s4 + $0x2] sm:$0x1]
  %v83 = vld [vmem:[%s4 + $0x3] sm:$0x1]
  %v84 = vld [vmem:[%s4 + $0x4] sm:$0x3]
  %v85 = vld [vmem:[%s4 + $0x6] sm:$0x3]
  %v86 = vld [vmem:[%s4 + $0x8] sm:$0xf]
  %v87 = vld [vmem:[%s4 + $0xc] sm:$0x3]
  %v88 = vld [vmem:[%s4 + $0xe] sm:$0x1]
  %v89 = vld [vmem:[%s4 + $0xf] sm:$0x1]
  %v90 = vld [vmem:[%s4 + $0x10] sm:$0x1]
  %v91 = vld [vmem:[%s5] sm:$0xff]
  %v92 = vld [vmem:[%s5 + $0x8] sm:$0xff]
  %v93 = vld [vmem:[%s5 + $0x10] sm:$0x3]
  %v94 = vld [vmem:[%s5 + $0x18] sm:$0x3]
  %v95 = vld [vmem:[%s5 + $0x20] sm:$0xff]
  %v96 = vld [vmem:[%s5 + $0x30] sm:$0xff]
  %v97 = vld [vmem:[%s5 + $0x40] sm:$0xff]
  %v98 = vld [vmem:[%s5 + $0x50] sm:$0xff]
  %v99 = vld [vmem:[%s5 + $0x60] sm:$0xff]
  %v100 = vld [vmem:[%s5 + $0x70] sm:$0xff]
  %v101 = vld [vmem:[%s5 + $0x80] sm:$0xff]
  %v102 = vld [vmem:[%s5 + $0x90] sm:$0xff]
  %v103 = vld [vmem:[%s5 + $0xa0] sm:$0xff]
  %v104 = vld [vmem:[%s5 + $0xb0] sm:$0xff]
  %v105 = vld [vmem:[%s5 + $0xc0] sm:$0xff]
  %v106 = vld [vmem:[%s5 + $0xd0] sm:$0xff]
  %v107 = vld [vmem:[%s5 + $0xe0] sm:$0xff]
  %v108 = vld [vmem:[%s5 + $0xf0] sm:$0xff]
  %v109 = vld [vmem:[%s5 + $0x100] sm:$0xff]
  %v110 = vld [vmem:[%s5 + $0x110] sm:$0xff]
  %v111 = vld [vmem:[%s5 + $0x120] sm:$0xff]
  %v112 = vld [vmem:[%s5 + $0x130] sm:$0xff]
  %v113 = vld [vmem:[%s5 + $0x140] sm:$0xff]
  %v114 = vld [vmem:[%s5 + $0x150] sm:$0xff]
  %v115 = vld [vmem:[%s5 + $0x160] sm:$0xff]
  %v116 = vld [vmem:[%s5 + $0x170] sm:$0x3]
  %v117 = vld [vmem:[%s5 + $0x180] sm:$0xff]
  %v118 = vld [vmem:[%s5 + $0x190] sm:$0xff]
  %v119 = vld [vmem:[%s5 + $0x1a0] sm:$0xff]
  %v120 = vld [vmem:[%s5 + $0x1b0] sm:$0xff]
  %v121 = vld [vmem:[%s5 + $0x1c0] sm:$0xff]
  %v122 = vld [vmem:[%s5 + $0x1d0] sm:$0xff]
  %v123 = vld [vmem:[%s5 + $0x1e0] sm:$0xff]
  %v124 = vpack.c.bf16 %v24, %v24
  %v126 = vlaneseq
  %v127 = vshrl.u32 %v126, 7
  %v128 = vsub.s32 0, %v127
  %v129 = vrot.slane %v80, %v128
  %v133 = vunpack.c.l.b16 %v33
  %v134 = vunpack.c.l.b16 %v34
  %v135 = vpack.c.b16 %v134, %v133
  %vm137 = vcmask 130048
  %v139 = vsel %vm137, %v124, 0
  %141 = vmatprep.subr.bf16.mxu0 0
  %142 = vmatpush1.bf16.msra.mxu0 %v135
  %143 = vmatprep.subr.bf16.mxu0 0
  %144 = vmatpush1.bf16.msra.mxu0 0
  %145 = vmatprep.subr.bf16.mxu0 0
  %146 = vmatpush1.bf16.msra.mxu0 0
  %147 = vmatprep.subr.bf16.mxu0 0
  %148 = vmatpush1.bf16.msra.mxu0 0
  %149 = vmatprep.subr.bf16.mxu0 0
  %150 = vmatpush1.bf16.msra.mxu0 0
  %151 = vmatprep.subr.bf16.mxu0 0
  %152 = vmatpush1.bf16.msra.mxu0 0
  %153 = vmatprep.subr.bf16.mxu0 0
  %154 = vmatpush1.bf16.msra.mxu0 0
  %155 = vmatprep.subr.bf16.mxu0 0
  %156 = vmatpush1.bf16.msra.mxu0 0
  %157 = vmatprep.subr.bf16.mxu0 0
  %158 = vmatpush1.bf16.msra.mxu0 0
  %159 = vmatprep.subr.bf16.mxu0 0
  %160 = vmatpush1.bf16.msra.mxu0 0
  %161 = vmatprep.subr.bf16.mxu0 0
  %162 = vmatpush1.bf16.msra.mxu0 0
  %163 = vmatprep.subr.bf16.mxu0 0
  %164 = vmatpush1.bf16.msra.mxu0 0
  %165 = vmatprep.subr.bf16.mxu0 0
  %166 = vmatpush1.bf16.msra.mxu0 0
  %167 = vmatprep.subr.bf16.mxu0 0
  %168 = vmatpush1.bf16.msra.mxu0 0
  %169 = vmatprep.subr.bf16.mxu0 0
  %170 = vmatpush1.bf16.msra.mxu0 0
  %171 = vmatprep.subr.bf16.mxu0 0
  %172 = vmatpush1.bf16.msra.mxu0 0
  %173 = vmatprep.mubr.bf16.mxu0 0
  %174 = vmatmul.mubr.bf16.gmra.mrb[0].mxu0 %v139
  %v175 = vpop.f32.mrb[0].mxu0
  %v176 = vadd.f32 %v129, %v175
  %v177 = vpop.f32.mrb[0].mxu0
  %v178 = vpop.f32.mrb[0].mxu0
  %v179 = vpop.f32.mrb[0].mxu0
  %180 = vdwg.mxu0
  %v181 = vmax.f32 %v176, 0.0
  %v182 = vpack.c.bf16 %v181, %v181
  %v184 = vlaneseq
  %v185 = vshrl.u32 %v184, 7
  %v186 = vsub.s32 0, %v185
  %v187 = vrot.slane %v84, %v186
  %v188 = vlaneseq
  %v189 = vshrl.u32 %v188, 7
  %v190 = vsub.s32 1, %v189
  %v191 = vrot.slane %v84, %v190
  %v198 = vunpack.c.l.b16 %v60
  %v199 = vunpack.c.h.b16 %v60
  %v200 = vunpack.c.l.b16 %v61
  %v201 = vunpack.c.h.b16 %v61
  %v202 = vunpack.c.l.b16 %v62
  %v203 = vunpack.c.h.b16 %v62
  %v204 = vunpack.c.l.b16 %v63
  %v205 = vunpack.c.h.b16 %v63
  %v206 = vpack.c.b16 %v200, %v198
  %v207 = vpack.c.b16 %v201, %v199
  %v208 = vpack.c.b16 %v204, %v202
  %v209 = vpack.c.b16 %v205, %v203
  %vm214 = vcmask 261120
  %v216 = vsel %vm214, %v182, 0
  %218 = vmatprep.subr.bf16.mxu0 %v207
  %219 = vmatpush1.bf16.msra.mxu0 %v206
  %220 = vmatprep.subr.bf16.mxu0 %v209
  %221 = vmatpush1.bf16.msra.mxu0 %v208
  %222 = vmatprep.subr.bf16.mxu0 0
  %223 = vmatpush1.bf16.msra.mxu0 0
  %224 = vmatprep.subr.bf16.mxu0 0
  %225 = vmatpush1.bf16.msra.mxu0 0
  %226 = vmatprep.subr.bf16.mxu0 0
  %227 = vmatpush1.bf16.msra.mxu0 0
  %228 = vmatprep.subr.bf16.mxu0 0
  %229 = vmatpush1.bf16.msra.mxu0 0
  %230 = vmatprep.subr.bf16.mxu0 0
  %231 = vmatpush1.bf16.msra.mxu0 0
  %232 = vmatprep.subr.bf16.mxu0 0
  %233 = vmatpush1.bf16.msra.mxu0 0
  %234 = vmatprep.subr.bf16.mxu0 0
  %235 = vmatpush1.bf16.msra.mxu0 0
  %236 = vmatprep.subr.bf16.mxu0 0
  %237 = vmatpush1.bf16.msra.mxu0 0
  %238 = vmatprep.subr.bf16.mxu0 0
  %239 = vmatpush1.bf16.msra.mxu0 0
  %240 = vmatprep.subr.bf16.mxu0 0
  %241 = vmatpush1.bf16.msra.mxu0 0
  %242 = vmatprep.subr.bf16.mxu0 0
  %243 = vmatpush1.bf16.msra.mxu0 0
  %244 = vmatprep.subr.bf16.mxu0 0
  %245 = vmatpush1.bf16.msra.mxu0 0
  %246 = vmatprep.subr.bf16.mxu0 0
  %247 = vmatpush1.bf16.msra.mxu0 0
  %248 = vmatprep.subr.bf16.mxu0 0
  %249 = vmatpush1.bf16.msra.mxu0 0
  %250 = vmatprep.mubr.bf16.mxu0 0
  %251 = vmatmul.mubr.bf16.gmra.mrb[0].mxu0 %v216
  %v252 = vpop.f32.mrb[0].mxu0
  %v253 = vadd.f32 %v187, %v252
  %v254 = vpop.f32.mrb[0].mxu0
  %v255 = vadd.f32 %v191, %v254
  %v256 = vpop.f32.mrb[0].mxu0
  %v257 = vpop.f32.mrb[0].mxu0
  %258 = vdwg.mxu0
  %v259 = vmul.f32 %v255, 0.5
  %v260 = vmul.f32 %v259, 1.442695
  %v261 = vpow.pop %v260
  %v262 = vmul.f32 %v261, %v25
  %v263 = vadd.f32 %v262, %v253
  %v265 = vlaneseq
  %v266 = vshrl.u32 %v265, 7
  %v267 = vsub.s32 0, %v266
  %v268 = vrot.slane %v88, %v267
  %v270 = vmul.f32 %v263, %v268
  %v271 = vmul.f32 %v270, %v263
  %vm272 = vcmask 162816
  %v273 = vsel %vm272, %v271, 0.0
  %274 = vadd.xlane.f32.xlu0 %v273
  %v275 = vpop.xlane.xlu0 %274
  %v277 = vsel %vm272, %v270, 0
  %v280 = vsel %vm272, %v29, 0
  %282 = vmatprep.subr.mxu0 0.0
  %283 = vmatpush1.xpose.msra.mxu0 %v280
  %284 = vmatprep.subr.mxu0 0.0
  %285 = vmatpush1.xpose.msra.mxu0 0.0
  %286 = vmatprep.subr.mxu0 0.0
  %287 = vmatpush1.xpose.msra.mxu0 0.0
  %288 = vmatprep.subr.mxu0 0.0
  %289 = vmatpush1.xpose.msra.mxu0 0.0
  %290 = vmatprep.subr.mxu0 0.0
  %291 = vmatpush1.xpose.msra.mxu0 0.0
  %292 = vmatprep.subr.mxu0 0.0
  %293 = vmatpush1.xpose.msra.mxu0 0.0
  %294 = vmatprep.subr.mxu0 0.0
  %295 = vmatpush1.xpose.msra.mxu0 0.0
  %296 = vmatprep.subr.mxu0 0.0
  %297 = vmatpush1.xpose.msra.mxu0 0.0
  %298 = vmatprep.subr.mxu0 0.0
  %299 = vmatpush1.xpose.msra.mxu0 0.0
  %300 = vmatprep.subr.mxu0 0.0
  %301 = vmatpush1.xpose.msra.mxu0 0.0
  %302 = vmatprep.subr.mxu0 0.0
  %303 = vmatpush1.xpose.msra.mxu0 0.0
  %304 = vmatprep.subr.mxu0 0.0
  %305 = vmatpush1.xpose.msra.mxu0 0.0
  %306 = vmatprep.subr.mxu0 0.0
  %307 = vmatpush1.xpose.msra.mxu0 0.0
  %308 = vmatprep.subr.mxu0 0.0
  %309 = vmatpush1.xpose.msra.mxu0 0.0
  %310 = vmatprep.subr.mxu0 0.0
  %311 = vmatpush1.xpose.msra.mxu0 0.0
  %312 = vmatprep.subr.mxu0 0.0
  %313 = vmatpush1.xpose.msra.mxu0 0.0
  %314 = vmatprep.subr.mxu0 0.0
  %315 = vmatpush1.xpose.msra.mxu0 0.0
  %316 = vmatprep.subr.mxu0 0.0
  %317 = vmatpush1.xpose.msra.mxu0 0.0
  %318 = vmatprep.subr.mxu0 0.0
  %319 = vmatpush1.xpose.msra.mxu0 0.0
  %320 = vmatprep.subr.mxu0 0.0
  %321 = vmatpush1.xpose.msra.mxu0 0.0
  %322 = vmatprep.subr.mxu0 0.0
  %323 = vmatpush1.xpose.msra.mxu0 0.0
  %324 = vmatprep.subr.mxu0 0.0
  %325 = vmatpush1.xpose.msra.mxu0 0.0
  %326 = vmatprep.subr.mxu0 0.0
  %327 = vmatpush1.xpose.msra.mxu0 0.0
  %328 = vmatprep.subr.mxu0 0.0
  %329 = vmatpush1.xpose.msra.mxu0 0.0
  %330 = vmatprep.subr.mxu0 0.0
  %331 = vmatpush1.xpose.msra.mxu0 0.0
  %332 = vmatprep.subr.mxu0 0.0
  %333 = vmatpush1.xpose.msra.mxu0 0.0
  %334 = vmatprep.subr.mxu0 0.0
  %335 = vmatpush1.xpose.msra.mxu0 0.0
  %336 = vmatprep.subr.mxu0 0.0
  %337 = vmatpush1.xpose.msra.mxu0 0.0
  %338 = vmatprep.subr.mxu0 0.0
  %339 = vmatpush1.xpose.msra.mxu0 0.0
  %340 = vmatprep.subr.mxu0 0.0
  %341 = vmatpush1.xpose.msra.mxu0 0.0
  %342 = vmatprep.subr.mxu0 0.0
  %343 = vmatpush1.xpose.msra.mxu0 0.0
  %344 = vmatprep.subr.mxu0 0.0
  %345 = vmatpush1.xpose.msra.mxu0 0.0
  %346 = vmatprep.mubr.f32.mxu0 0.0
  %347 = vmatmul.mubr.f32.gmra.mrb[0].mxu0 %v277
  %v348 = vpop.f32.mrb[0].mxu0
  %v349 = vadd.f32 0.0, %v348
  %v350 = vpop.f32.mrb[0].mxu0
  %351 = vdwg.mxu0
  %v352 = vadd.f32 %v275, %v32
  %v353 = vmul.f32 %v349, 2.0
  %v354 = vsub.f32 %v352, %v353
  %v355 = vmul.f32 %v354, -0.5
  %v356 = vmul.f32 %v355, 1.442695
  %v357 = vpow.pop %v356
  %v358 = vmul.f32 %v357, 0.1
  %vm359 = vcmask 64512
  %v361 = vsel %vm359, %v358, 0
  %363 = vmatprep.subr.mxu0 0.0
  %364 = vmatpush1.msra.mxu0 %v30
  %365 = vmatprep.subr.mxu0 0.0
  %366 = vmatpush1.msra.mxu0 0.0
  %367 = vmatprep.subr.mxu0 0.0
  %368 = vmatpush1.msra.mxu0 0.0
  %369 = vmatprep.subr.mxu0 0.0
  %370 = vmatpush1.msra.mxu0 0.0
  %371 = vmatprep.subr.mxu0 0.0
  %372 = vmatpush1.msra.mxu0 0.0
  %373 = vmatprep.subr.mxu0 0.0
  %374 = vmatpush1.msra.mxu0 0.0
  %375 = vmatprep.subr.mxu0 0.0
  %376 = vmatpush1.msra.mxu0 0.0
  %377 = vmatprep.subr.mxu0 0.0
  %378 = vmatpush1.msra.mxu0 0.0
  %379 = vmatprep.subr.mxu0 0.0
  %380 = vmatpush1.msra.mxu0 0.0
  %381 = vmatprep.subr.mxu0 0.0
  %382 = vmatpush1.msra.mxu0 0.0
  %383 = vmatprep.subr.mxu0 0.0
  %384 = vmatpush1.msra.mxu0 0.0
  %385 = vmatprep.subr.mxu0 0.0
  %386 = vmatpush1.msra.mxu0 0.0
  %387 = vmatprep.subr.mxu0 0.0
  %388 = vmatpush1.msra.mxu0 0.0
  %389 = vmatprep.subr.mxu0 0.0
  %390 = vmatpush1.msra.mxu0 0.0
  %391 = vmatprep.subr.mxu0 0.0
  %392 = vmatpush1.msra.mxu0 0.0
  %393 = vmatprep.subr.mxu0 0.0
  %394 = vmatpush1.msra.mxu0 0.0
  %395 = vmatprep.subr.mxu0 0.0
  %396 = vmatpush1.msra.mxu0 0.0
  %397 = vmatprep.subr.mxu0 0.0
  %398 = vmatpush1.msra.mxu0 0.0
  %399 = vmatprep.subr.mxu0 0.0
  %400 = vmatpush1.msra.mxu0 0.0
  %401 = vmatprep.subr.mxu0 0.0
  %402 = vmatpush1.msra.mxu0 0.0
  %403 = vmatprep.subr.mxu0 0.0
  %404 = vmatpush1.msra.mxu0 0.0
  %405 = vmatprep.subr.mxu0 0.0
  %406 = vmatpush1.msra.mxu0 0.0
  %407 = vmatprep.subr.mxu0 0.0
  %408 = vmatpush1.msra.mxu0 0.0
  %409 = vmatprep.subr.mxu0 0.0
  %410 = vmatpush1.msra.mxu0 0.0
  %411 = vmatprep.subr.mxu0 0.0
  %412 = vmatpush1.msra.mxu0 0.0
  %413 = vmatprep.subr.mxu0 0.0
  %414 = vmatpush1.msra.mxu0 0.0
  %415 = vmatprep.subr.mxu0 0.0
  %416 = vmatpush1.msra.mxu0 0.0
  %417 = vmatprep.subr.mxu0 0.0
  %418 = vmatpush1.msra.mxu0 0.0
  %419 = vmatprep.subr.mxu0 0.0
  %420 = vmatpush1.msra.mxu0 0.0
  %421 = vmatprep.subr.mxu0 0.0
  %422 = vmatpush1.msra.mxu0 0.0
  %423 = vmatprep.subr.mxu0 0.0
  %424 = vmatpush1.msra.mxu0 0.0
  %425 = vmatprep.subr.mxu0 0.0
  %426 = vmatpush1.msra.mxu0 0.0
  %427 = vmatprep.mubr.f32.mxu0 0.0
  %428 = vmatmul.mubr.f32.gmra.mrb[0].mxu0 %v361
  %v429 = vpop.f32.mrb[0].mxu0
  %v430 = vadd.f32 0.0, %v429
  %v431 = vpop.f32.mrb[0].mxu0
  %432 = vdwg.mxu0
  %433 = vmatprep.subr.mxu0 0.0
  %434 = vmatpush1.msra.mxu0 %v31
  %435 = vmatprep.subr.mxu0 0.0
  %436 = vmatpush1.msra.mxu0 0.0
  %437 = vmatprep.subr.mxu0 0.0
  %438 = vmatpush1.msra.mxu0 0.0
  %439 = vmatprep.subr.mxu0 0.0
  %440 = vmatpush1.msra.mxu0 0.0
  %441 = vmatprep.subr.mxu0 0.0
  %442 = vmatpush1.msra.mxu0 0.0
  %443 = vmatprep.subr.mxu0 0.0
  %444 = vmatpush1.msra.mxu0 0.0
  %445 = vmatprep.subr.mxu0 0.0
  %446 = vmatpush1.msra.mxu0 0.0
  %447 = vmatprep.subr.mxu0 0.0
  %448 = vmatpush1.msra.mxu0 0.0
  %449 = vmatprep.subr.mxu0 0.0
  %450 = vmatpush1.msra.mxu0 0.0
  %451 = vmatprep.subr.mxu0 0.0
  %452 = vmatpush1.msra.mxu0 0.0
  %453 = vmatprep.subr.mxu0 0.0
  %454 = vmatpush1.msra.mxu0 0.0
  %455 = vmatprep.subr.mxu0 0.0
  %456 = vmatpush1.msra.mxu0 0.0
  %457 = vmatprep.subr.mxu0 0.0
  %458 = vmatpush1.msra.mxu0 0.0
  %459 = vmatprep.subr.mxu0 0.0
  %460 = vmatpush1.msra.mxu0 0.0
  %461 = vmatprep.subr.mxu0 0.0
  %462 = vmatpush1.msra.mxu0 0.0
  %463 = vmatprep.subr.mxu0 0.0
  %464 = vmatpush1.msra.mxu0 0.0
  %465 = vmatprep.subr.mxu0 0.0
  %466 = vmatpush1.msra.mxu0 0.0
  %467 = vmatprep.subr.mxu0 0.0
  %468 = vmatpush1.msra.mxu0 0.0
  %469 = vmatprep.subr.mxu0 0.0
  %470 = vmatpush1.msra.mxu0 0.0
  %471 = vmatprep.subr.mxu0 0.0
  %472 = vmatpush1.msra.mxu0 0.0
  %473 = vmatprep.subr.mxu0 0.0
  %474 = vmatpush1.msra.mxu0 0.0
  %475 = vmatprep.subr.mxu0 0.0
  %476 = vmatpush1.msra.mxu0 0.0
  %477 = vmatprep.subr.mxu0 0.0
  %478 = vmatpush1.msra.mxu0 0.0
  %479 = vmatprep.subr.mxu0 0.0
  %480 = vmatpush1.msra.mxu0 0.0
  %481 = vmatprep.subr.mxu0 0.0
  %482 = vmatpush1.msra.mxu0 0.0
  %483 = vmatprep.subr.mxu0 0.0
  %484 = vmatpush1.msra.mxu0 0.0
  %485 = vmatprep.subr.mxu0 0.0
  %486 = vmatpush1.msra.mxu0 0.0
  %487 = vmatprep.subr.mxu0 0.0
  %488 = vmatpush1.msra.mxu0 0.0
  %489 = vmatprep.subr.mxu0 0.0
  %490 = vmatpush1.msra.mxu0 0.0
  %491 = vmatprep.subr.mxu0 0.0
  %492 = vmatpush1.msra.mxu0 0.0
  %493 = vmatprep.subr.mxu0 0.0
  %494 = vmatpush1.msra.mxu0 0.0
  %495 = vmatprep.subr.mxu0 0.0
  %496 = vmatpush1.msra.mxu0 0.0
  %497 = vmatprep.mubr.f32.mxu0 0.0
  %498 = vmatmul.mubr.f32.gmra.mrb[0].mxu0 %v361
  %v499 = vpop.f32.mrb[0].mxu0
  %v500 = vadd.f32 0.0, %v499
  %v501 = vpop.f32.mrb[0].mxu0
  %502 = vdwg.mxu0
  %v503 = vmul.f32 %v430, %v358
  %v504 = vsel %vm359, %v503, 0.0
  %505 = vadd.xlane.f32.xlu0 %v504
  %v506 = vpop.xlane.xlu0 %505
  %v507 = vsub.f32 0.1, %v506
  %v508 = vmax.f32 %v507, 1e-08
  %v509 = vrsqrt.pop %v508
  %v510 = vmul.f32 %v508, %v509
  %vm511 = vcmp.eq.f32.partialorder %v508, inf
  %v512 = vsel %vm511, %v508, %v510
  %vm513 = vcmp.eq.f32.partialorder %v508, 0.0
  %v514 = vand.u32 %v508, 2147483648
  %v515 = vsel %vm513, %v514, %v512
  %v516 = vmul.f32 %v515, %v26
  %v517 = vadd.f32 %v516, %v500
  %v518 = vpack.c.bf16 %v517, %v517
  %v520 = vlaneseq
  %v521 = vshrl.u32 %v520, 7
  %v522 = vsub.s32 0, %v521
  %v523 = vrot.slane %v81, %v522
  %v538 = vunpack.c.l.b16 %v35
  %v539 = vunpack.c.l.b16 %v36
  %v540 = vunpack.c.l.b16 %v37
  %v541 = vunpack.c.l.b16 %v38
  %v542 = vunpack.c.l.b16 %v39
  %v543 = vunpack.c.l.b16 %v40
  %v544 = vunpack.c.l.b16 %v41
  %v545 = vunpack.c.l.b16 %v42
  %v546 = vunpack.c.l.b16 %v43
  %v547 = vunpack.c.l.b16 %v44
  %v548 = vunpack.c.l.b16 %v45
  %v549 = vunpack.c.l.b16 %v46
  %v550 = vunpack.c.l.b16 %v47
  %v551 = vpack.c.b16 %v539, %v538
  %v552 = vpack.c.b16 %v541, %v540
  %v553 = vpack.c.b16 %v543, %v542
  %v554 = vpack.c.b16 %v545, %v544
  %v555 = vpack.c.b16 %v547, %v546
  %v556 = vpack.c.b16 %v549, %v548
  %v557 = vpack.c.b16 %v550, %v550
  %vm564 = vcmask 818176
  %v566 = vsel %vm564, %v518, 0
  %vm568 = vcmask 1041408
  %v570 = vsel %vm568, %v557, 0
  %572 = vmatprep.subr.bf16.mxu0 0
  %573 = vmatpush1.bf16.msra.mxu0 %v551
  %574 = vmatprep.subr.bf16.mxu0 0
  %575 = vmatpush1.bf16.msra.mxu0 %v552
  %576 = vmatprep.subr.bf16.mxu0 0
  %577 = vmatpush1.bf16.msra.mxu0 %v553
  %578 = vmatprep.subr.bf16.mxu0 0
  %579 = vmatpush1.bf16.msra.mxu0 %v554
  %580 = vmatprep.subr.bf16.mxu0 0
  %581 = vmatpush1.bf16.msra.mxu0 %v555
  %582 = vmatprep.subr.bf16.mxu0 0
  %583 = vmatpush1.bf16.msra.mxu0 %v556
  %584 = vmatprep.subr.bf16.mxu0 0
  %585 = vmatpush1.bf16.msra.mxu0 %v570
  %586 = vmatprep.subr.bf16.mxu0 0
  %587 = vmatpush1.bf16.msra.mxu0 0
  %588 = vmatprep.subr.bf16.mxu0 0
  %589 = vmatpush1.bf16.msra.mxu0 0
  %590 = vmatprep.subr.bf16.mxu0 0
  %591 = vmatpush1.bf16.msra.mxu0 0
  %592 = vmatprep.subr.bf16.mxu0 0
  %593 = vmatpush1.bf16.msra.mxu0 0
  %594 = vmatprep.subr.bf16.mxu0 0
  %595 = vmatpush1.bf16.msra.mxu0 0
  %596 = vmatprep.subr.bf16.mxu0 0
  %597 = vmatpush1.bf16.msra.mxu0 0
  %598 = vmatprep.subr.bf16.mxu0 0
  %599 = vmatpush1.bf16.msra.mxu0 0
  %600 = vmatprep.subr.bf16.mxu0 0
  %601 = vmatpush1.bf16.msra.mxu0 0
  %602 = vmatprep.subr.bf16.mxu0 0
  %603 = vmatpush1.bf16.msra.mxu0 0
  %604 = vmatprep.mubr.bf16.mxu0 0
  %605 = vmatmul.mubr.bf16.gmra.mrb[0].mxu0 %v566
  %v606 = vpop.f32.mrb[0].mxu0
  %v607 = vadd.f32 %v523, %v606
  %v608 = vpop.f32.mrb[0].mxu0
  %v609 = vpop.f32.mrb[0].mxu0
  %v610 = vpop.f32.mrb[0].mxu0
  %611 = vdwg.mxu0
  %v612 = vmax.f32 %v607, 0.0
  %v613 = vpack.c.bf16 %v612, %v612
  %v615 = vlaneseq
  %v616 = vshrl.u32 %v615, 7
  %v617 = vsub.s32 0, %v616
  %v618 = vrot.slane %v85, %v617
  %v619 = vlaneseq
  %v620 = vshrl.u32 %v619, 7
  %v621 = vsub.s32 1, %v620
  %v622 = vrot.slane %v85, %v621
  %v629 = vunpack.c.l.b16 %v64
  %v630 = vunpack.c.h.b16 %v64
  %v631 = vunpack.c.l.b16 %v65
  %v632 = vunpack.c.h.b16 %v65
  %v633 = vunpack.c.l.b16 %v66
  %v634 = vunpack.c.h.b16 %v66
  %v635 = vunpack.c.l.b16 %v67
  %v636 = vunpack.c.h.b16 %v67
  %v637 = vpack.c.b16 %v631, %v629
  %v638 = vpack.c.b16 %v632, %v630
  %v639 = vpack.c.b16 %v635, %v633
  %v640 = vpack.c.b16 %v636, %v634
  %v646 = vsel %vm214, %v613, 0
  %648 = vmatprep.subr.bf16.mxu0 %v638
  %649 = vmatpush1.bf16.msra.mxu0 %v637
  %650 = vmatprep.subr.bf16.mxu0 %v640
  %651 = vmatpush1.bf16.msra.mxu0 %v639
  %652 = vmatprep.subr.bf16.mxu0 0
  %653 = vmatpush1.bf16.msra.mxu0 0
  %654 = vmatprep.subr.bf16.mxu0 0
  %655 = vmatpush1.bf16.msra.mxu0 0
  %656 = vmatprep.subr.bf16.mxu0 0
  %657 = vmatpush1.bf16.msra.mxu0 0
  %658 = vmatprep.subr.bf16.mxu0 0
  %659 = vmatpush1.bf16.msra.mxu0 0
  %660 = vmatprep.subr.bf16.mxu0 0
  %661 = vmatpush1.bf16.msra.mxu0 0
  %662 = vmatprep.subr.bf16.mxu0 0
  %663 = vmatpush1.bf16.msra.mxu0 0
  %664 = vmatprep.subr.bf16.mxu0 0
  %665 = vmatpush1.bf16.msra.mxu0 0
  %666 = vmatprep.subr.bf16.mxu0 0
  %667 = vmatpush1.bf16.msra.mxu0 0
  %668 = vmatprep.subr.bf16.mxu0 0
  %669 = vmatpush1.bf16.msra.mxu0 0
  %670 = vmatprep.subr.bf16.mxu0 0
  %671 = vmatpush1.bf16.msra.mxu0 0
  %672 = vmatprep.subr.bf16.mxu0 0
  %673 = vmatpush1.bf16.msra.mxu0 0
  %674 = vmatprep.subr.bf16.mxu0 0
  %675 = vmatpush1.bf16.msra.mxu0 0
  %676 = vmatprep.subr.bf16.mxu0 0
  %677 = vmatpush1.bf16.msra.mxu0 0
  %678 = vmatprep.subr.bf16.mxu0 0
  %679 = vmatpush1.bf16.msra.mxu0 0
  %680 = vmatprep.mubr.bf16.mxu0 0
  %681 = vmatmul.mubr.bf16.gmra.mrb[0].mxu0 %v646
  %v682 = vpop.f32.mrb[0].mxu0
  %v683 = vadd.f32 %v618, %v682
  %v684 = vpop.f32.mrb[0].mxu0
  %v685 = vadd.f32 %v622, %v684
  %v686 = vpop.f32.mrb[0].mxu0
  %v687 = vpop.f32.mrb[0].mxu0
  %688 = vdwg.mxu0
  %689 = vst [vmem:[%s6] sm:$0xff] %v683
  %690 = vst [vmem:[%s6 + $0x8] sm:$0xff] %v685
  %vm691 = vcmask 80896
  %v693 = vsel %vm691, %v685, 0
  %v696 = vsel %vm568, %v93, 0
  %v699 = vsel %vm568, %v94, 0
  %701 = vmatprep.subr.mxu0 %v92
  %702 = vmatpush1.msra.mxu0 %v91
  %703 = vmatprep.subr.mxu0 %v699
  %704 = vmatpush1.msra.mxu0 %v696
  %705 = vmatprep.subr.mxu0 0.0
  %706 = vmatpush1.msra.mxu0 0.0
  %707 = vmatprep.subr.mxu0 0.0
  %708 = vmatpush1.msra.mxu0 0.0
  %709 = vmatprep.subr.mxu0 0.0
  %710 = vmatpush1.msra.mxu0 0.0
  %711 = vmatprep.subr.mxu0 0.0
  %712 = vmatpush1.msra.mxu0 0.0
  %713 = vmatprep.subr.mxu0 0.0
  %714 = vmatpush1.msra.mxu0 0.0
  %715 = vmatprep.subr.mxu0 0.0
  %716 = vmatpush1.msra.mxu0 0.0
  %717 = vmatprep.subr.mxu0 0.0
  %718 = vmatpush1.msra.mxu0 0.0
  %719 = vmatprep.subr.mxu0 0.0
  %720 = vmatpush1.msra.mxu0 0.0
  %721 = vmatprep.subr.mxu0 0.0
  %722 = vmatpush1.msra.mxu0 0.0
  %723 = vmatprep.subr.mxu0 0.0
  %724 = vmatpush1.msra.mxu0 0.0
  %725 = vmatprep.subr.mxu0 0.0
  %726 = vmatpush1.msra.mxu0 0.0
  %727 = vmatprep.subr.mxu0 0.0
  %728 = vmatpush1.msra.mxu0 0.0
  %729 = vmatprep.subr.mxu0 0.0
  %730 = vmatpush1.msra.mxu0 0.0
  %731 = vmatprep.subr.mxu0 0.0
  %732 = vmatpush1.msra.mxu0 0.0
  %733 = vmatprep.subr.mxu0 0.0
  %734 = vmatpush1.msra.mxu0 0.0
  %735 = vmatprep.subr.mxu0 0.0
  %736 = vmatpush1.msra.mxu0 0.0
  %737 = vmatprep.subr.mxu0 0.0
  %738 = vmatpush1.msra.mxu0 0.0
  %739 = vmatprep.subr.mxu0 0.0
  %740 = vmatpush1.msra.mxu0 0.0
  %741 = vmatprep.subr.mxu0 0.0
  %742 = vmatpush1.msra.mxu0 0.0
  %743 = vmatprep.subr.mxu0 0.0
  %744 = vmatpush1.msra.mxu0 0.0
  %745 = vmatprep.subr.mxu0 0.0
  %746 = vmatpush1.msra.mxu0 0.0
  %747 = vmatprep.subr.mxu0 0.0
  %748 = vmatpush1.msra.mxu0 0.0
  %749 = vmatprep.subr.mxu0 0.0
  %750 = vmatpush1.msra.mxu0 0.0
  %751 = vmatprep.subr.mxu0 0.0
  %752 = vmatpush1.msra.mxu0 0.0
  %753 = vmatprep.subr.mxu0 0.0
  %754 = vmatpush1.msra.mxu0 0.0
  %755 = vmatprep.subr.mxu0 0.0
  %756 = vmatpush1.msra.mxu0 0.0
  %757 = vmatprep.subr.mxu0 0.0
  %758 = vmatpush1.msra.mxu0 0.0
  %759 = vmatprep.subr.mxu0 0.0
  %760 = vmatpush1.msra.mxu0 0.0
  %761 = vmatprep.subr.mxu0 0.0
  %762 = vmatpush1.msra.mxu0 0.0
  %763 = vmatprep.subr.mxu0 0.0
  %764 = vmatpush1.msra.mxu0 0.0
  %765 = vmatprep.mubr.f32.mxu0 0.0
  %766 = vmatmul.mubr.f32.gmra.mrb[0].mxu0 %v693
  %v767 = vpop.f32.mrb[0].mxu0
  %v768 = vadd.f32 0.0, %v767
  %v769 = vpop.f32.mrb[0].mxu0
  %v770 = vadd.f32 0.0, %v769
  %771 = vdwg.mxu0
  %v772 = vmul.f32 %v768, %v27
  %v773 = vmul.f32 %v770, %v28
  %v775 = vsel %vm214, %v773, 0
  %777 = vmatprep.subr.mxu0 0.0
  %778 = vmatpush1.msra.mxu0 %v95
  %779 = vmatprep.subr.mxu0 0.0
  %780 = vmatpush1.msra.mxu0 %v96
  %781 = vmatprep.subr.mxu0 0.0
  %782 = vmatpush1.msra.mxu0 %v97
  %783 = vmatprep.subr.mxu0 0.0
  %784 = vmatpush1.msra.mxu0 %v98
  %785 = vmatprep.subr.mxu0 0.0
  %786 = vmatpush1.msra.mxu0 %v99
  %787 = vmatprep.subr.mxu0 0.0
  %788 = vmatpush1.msra.mxu0 %v100
  %789 = vmatprep.subr.mxu0 0.0
  %790 = vmatpush1.msra.mxu0 %v101
  %791 = vmatprep.subr.mxu0 0.0
  %792 = vmatpush1.msra.mxu0 %v102
  %793 = vmatprep.subr.mxu0 0.0
  %794 = vmatpush1.msra.mxu0 %v103
  %795 = vmatprep.subr.mxu0 0.0
  %796 = vmatpush1.msra.mxu0 %v104
  %797 = vmatprep.subr.mxu0 0.0
  %798 = vmatpush1.msra.mxu0 %v105
  %799 = vmatprep.subr.mxu0 0.0
  %800 = vmatpush1.msra.mxu0 %v106
  %801 = vmatprep.subr.mxu0 0.0
  %802 = vmatpush1.msra.mxu0 %v107
  %803 = vmatprep.subr.mxu0 0.0
  %804 = vmatpush1.msra.mxu0 %v108
  %805 = vmatprep.subr.mxu0 0.0
  %806 = vmatpush1.msra.mxu0 %v109
  %807 = vmatprep.subr.mxu0 0.0
  %808 = vmatpush1.msra.mxu0 %v110
  %809 = vmatprep.subr.mxu0 0.0
  %810 = vmatpush1.msra.mxu0 %v111
  %811 = vmatprep.subr.mxu0 0.0
  %812 = vmatpush1.msra.mxu0 %v112
  %813 = vmatprep.subr.mxu0 0.0
  %814 = vmatpush1.msra.mxu0 %v113
  %815 = vmatprep.subr.mxu0 0.0
  %816 = vmatpush1.msra.mxu0 %v114
  %817 = vmatprep.subr.mxu0 0.0
  %818 = vmatpush1.msra.mxu0 0.0
  %819 = vmatprep.subr.mxu0 0.0
  %820 = vmatpush1.msra.mxu0 0.0
  %821 = vmatprep.subr.mxu0 0.0
  %822 = vmatpush1.msra.mxu0 0.0
  %823 = vmatprep.subr.mxu0 0.0
  %824 = vmatpush1.msra.mxu0 0.0
  %825 = vmatprep.subr.mxu0 0.0
  %826 = vmatpush1.msra.mxu0 0.0
  %827 = vmatprep.subr.mxu0 0.0
  %828 = vmatpush1.msra.mxu0 0.0
  %829 = vmatprep.subr.mxu0 0.0
  %830 = vmatpush1.msra.mxu0 0.0
  %831 = vmatprep.subr.mxu0 0.0
  %832 = vmatpush1.msra.mxu0 0.0
  %833 = vmatprep.subr.mxu0 0.0
  %834 = vmatpush1.msra.mxu0 0.0
  %835 = vmatprep.subr.mxu0 0.0
  %836 = vmatpush1.msra.mxu0 0.0
  %837 = vmatprep.subr.mxu0 0.0
  %838 = vmatpush1.msra.mxu0 0.0
  %839 = vmatprep.subr.mxu0 0.0
  %840 = vmatpush1.msra.mxu0 0.0
  %841 = vmatprep.mubr.f32.mxu0 %v775
  %842 = vmatmul.mubr.f32.gmra.mrb[0].mxu0 %v772
  %v843 = vpop.f32.mrb[0].mxu0
  %v844 = vadd.f32 0.0, %v843
  %v845 = vpop.f32.mrb[0].mxu0
  %846 = vdwg.mxu0
  %v847 = vadd.f32 %v683, %v844
  %v848 = vpack.c.bf16 %v847, %v847
  %v854 = vunpack.c.l.b16 %v50
  %v855 = vunpack.c.l.b16 %v51
  %v856 = vunpack.c.l.b16 %v52
  %v857 = vunpack.c.l.b16 %v53
  %v858 = vunpack.c.l.b16 %v54
  %v859 = vpack.c.b16 %v855, %v854
  %v860 = vpack.c.b16 %v857, %v856
  %v861 = vpack.c.b16 %v858, %v858
  %vm864 = vcmask 326656
  %v866 = vsel %vm864, %v848, 0
  %vm868 = vcmask 1043456
  %v870 = vsel %vm868, %v861, 0
  %872 = vmatprep.subr.bf16.mxu0 0
  %873 = vmatpush1.bf16.msra.mxu0 %v859
  %874 = vmatprep.subr.bf16.mxu0 0
  %875 = vmatpush1.bf16.msra.mxu0 %v860
  %876 = vmatprep.subr.bf16.mxu0 0
  %877 = vmatpush1.bf16.msra.mxu0 %v870
  %878 = vmatprep.subr.bf16.mxu0 0
  %879 = vmatpush1.bf16.msra.mxu0 0
  %880 = vmatprep.subr.bf16.mxu0 0
  %881 = vmatpush1.bf16.msra.mxu0 0
  %882 = vmatprep.subr.bf16.mxu0 0
  %883 = vmatpush1.bf16.msra.mxu0 0
  %884 = vmatprep.subr.bf16.mxu0 0
  %885 = vmatpush1.bf16.msra.mxu0 0
  %886 = vmatprep.subr.bf16.mxu0 0
  %887 = vmatpush1.bf16.msra.mxu0 0
  %888 = vmatprep.subr.bf16.mxu0 0
  %889 = vmatpush1.bf16.msra.mxu0 0
  %890 = vmatprep.subr.bf16.mxu0 0
  %891 = vmatpush1.bf16.msra.mxu0 0
  %892 = vmatprep.subr.bf16.mxu0 0
  %893 = vmatpush1.bf16.msra.mxu0 0
  %894 = vmatprep.subr.bf16.mxu0 0
  %895 = vmatpush1.bf16.msra.mxu0 0
  %896 = vmatprep.subr.bf16.mxu0 0
  %897 = vmatpush1.bf16.msra.mxu0 0
  %898 = vmatprep.subr.bf16.mxu0 0
  %899 = vmatpush1.bf16.msra.mxu0 0
  %900 = vmatprep.subr.bf16.mxu0 0
  %901 = vmatpush1.bf16.msra.mxu0 0
  %902 = vmatprep.subr.bf16.mxu0 0
  %903 = vmatpush1.bf16.msra.mxu0 0
  %904 = vmatprep.mubr.bf16.mxu0 0
  %905 = vmatmul.mubr.bf16.gmra.mrb[0].mxu0 %v866
  %v906 = vpop.f32.mrb[0].mxu0
  %v907 = vadd.f32 0.0, %v906
  %v908 = vpop.f32.mrb[0].mxu0
  %v909 = vpop.f32.mrb[0].mxu0
  %v910 = vpop.f32.mrb[0].mxu0
  %911 = vdwg.mxu0
  %v914 = vunpack.c.l.b16 %v48
  %v915 = vunpack.c.l.b16 %v49
  %v916 = vpack.c.b16 %v915, %v914
  %918 = vmatprep.subr.bf16.mxu0 0
  %919 = vmatpush1.bf16.msra.mxu0 %v916
  %920 = vmatprep.subr.bf16.mxu0 0
  %921 = vmatpush1.bf16.msra.mxu0 0
  %922 = vmatprep.subr.bf16.mxu0 0
  %923 = vmatpush1.bf16.msra.mxu0 0
  %924 = vmatprep.subr.bf16.mxu0 0
  %925 = vmatpush1.bf16.msra.mxu0 0
  %926 = vmatprep.subr.bf16.mxu0 0
  %927 = vmatpush1.bf16.msra.mxu0 0
  %928 = vmatprep.subr.bf16.mxu0 0
  %929 = vmatpush1.bf16.msra.mxu0 0
  %930 = vmatprep.subr.bf16.mxu0 0
  %931 = vmatpush1.bf16.msra.mxu0 0
  %932 = vmatprep.subr.bf16.mxu0 0
  %933 = vmatpush1.bf16.msra.mxu0 0
  %934 = vmatprep.subr.bf16.mxu0 0
  %935 = vmatpush1.bf16.msra.mxu0 0
  %936 = vmatprep.subr.bf16.mxu0 0
  %937 = vmatpush1.bf16.msra.mxu0 0
  %938 = vmatprep.subr.bf16.mxu0 0
  %939 = vmatpush1.bf16.msra.mxu0 0
  %940 = vmatprep.subr.bf16.mxu0 0
  %941 = vmatpush1.bf16.msra.mxu0 0
  %942 = vmatprep.subr.bf16.mxu0 0
  %943 = vmatpush1.bf16.msra.mxu0 0
  %944 = vmatprep.subr.bf16.mxu0 0
  %945 = vmatpush1.bf16.msra.mxu0 0
  %946 = vmatprep.subr.bf16.mxu0 0
  %947 = vmatpush1.bf16.msra.mxu0 0
  %948 = vmatprep.subr.bf16.mxu0 0
  %949 = vmatpush1.bf16.msra.mxu0 0
  %950 = vmatprep.mubr.bf16.mxu0 0
  %951 = vmatmul.mubr.bf16.gmra.mrb[0].mxu0 %v139
  %v952 = vpop.f32.mrb[0].mxu0
  %v953 = vadd.f32 %v907, %v952
  %v954 = vpop.f32.mrb[0].mxu0
  %v955 = vpop.f32.mrb[0].mxu0
  %v956 = vpop.f32.mrb[0].mxu0
  %957 = vdwg.mxu0
  %v959 = vlaneseq
  %v960 = vshrl.u32 %v959, 7
  %v961 = vsub.s32 0, %v960
  %v962 = vrot.slane %v82, %v961
  %v964 = vadd.f32 %v953, %v962
  %v965 = vmax.f32 %v964, 0.0
  %v966 = vpack.c.bf16 %v965, %v965
  %v968 = vlaneseq
  %v969 = vshrl.u32 %v968, 7
  %v970 = vsub.s32 0, %v969
  %v971 = vrot.slane %v86, %v970
  %v972 = vlaneseq
  %v973 = vshrl.u32 %v972, 7
  %v974 = vsub.s32 1, %v973
  %v975 = vrot.slane %v86, %v974
  %v976 = vlaneseq
  %v977 = vshrl.u32 %v976, 7
  %v978 = vsub.s32 2, %v977
  %v979 = vrot.slane %v86, %v978
  %v980 = vlaneseq
  %v981 = vshrl.u32 %v980, 7
  %v982 = vsub.s32 3, %v981
  %v983 = vrot.slane %v86, %v982
  %v996 = vunpack.c.l.b16 %v68
  %v997 = vunpack.c.h.b16 %v68
  %v998 = vunpack.c.l.b16 %v69
  %v999 = vunpack.c.h.b16 %v69
  %v1000 = vunpack.c.l.b16 %v70
  %v1001 = vunpack.c.h.b16 %v70
  %v1002 = vunpack.c.l.b16 %v71
  %v1003 = vunpack.c.h.b16 %v71
  %v1004 = vunpack.c.l.b16 %v72
  %v1005 = vunpack.c.h.b16 %v72
  %v1006 = vunpack.c.l.b16 %v73
  %v1007 = vunpack.c.h.b16 %v73
  %v1008 = vunpack.c.l.b16 %v74
  %v1009 = vunpack.c.h.b16 %v74
  %v1010 = vunpack.c.l.b16 %v75
  %v1011 = vunpack.c.h.b16 %v75
  %v1012 = vpack.c.b16 %v1000, %v996
  %v1013 = vpack.c.b16 %v1001, %v997
  %v1014 = vpack.c.b16 %v1002, %v998
  %v1015 = vpack.c.b16 %v1003, %v999
  %v1016 = vpack.c.b16 %v1008, %v1004
  %v1017 = vpack.c.b16 %v1009, %v1005
  %v1018 = vpack.c.b16 %v1010, %v1006
  %v1019 = vpack.c.b16 %v1011, %v1007
  %v1029 = vsel %vm214, %v966, 0
  %1031 = vmatprep.subr.bf16.mxu0 %v1013
  %1032 = vmatpush1.bf16.msra.mxu0 %v1012
  %1033 = vmatprep.subr.bf16.mxu0 %v1017
  %1034 = vmatpush1.bf16.msra.mxu0 %v1016
  %1035 = vmatprep.subr.bf16.mxu0 0
  %1036 = vmatpush1.bf16.msra.mxu0 0
  %1037 = vmatprep.subr.bf16.mxu0 0
  %1038 = vmatpush1.bf16.msra.mxu0 0
  %1039 = vmatprep.subr.bf16.mxu0 0
  %1040 = vmatpush1.bf16.msra.mxu0 0
  %1041 = vmatprep.subr.bf16.mxu0 0
  %1042 = vmatpush1.bf16.msra.mxu0 0
  %1043 = vmatprep.subr.bf16.mxu0 0
  %1044 = vmatpush1.bf16.msra.mxu0 0
  %1045 = vmatprep.subr.bf16.mxu0 0
  %1046 = vmatpush1.bf16.msra.mxu0 0
  %1047 = vmatprep.subr.bf16.mxu0 0
  %1048 = vmatpush1.bf16.msra.mxu0 0
  %1049 = vmatprep.subr.bf16.mxu0 0
  %1050 = vmatpush1.bf16.msra.mxu0 0
  %1051 = vmatprep.subr.bf16.mxu0 0
  %1052 = vmatpush1.bf16.msra.mxu0 0
  %1053 = vmatprep.subr.bf16.mxu0 0
  %1054 = vmatpush1.bf16.msra.mxu0 0
  %1055 = vmatprep.subr.bf16.mxu0 0
  %1056 = vmatpush1.bf16.msra.mxu0 0
  %1057 = vmatprep.subr.bf16.mxu0 0
  %1058 = vmatpush1.bf16.msra.mxu0 0
  %1059 = vmatprep.subr.bf16.mxu0 0
  %1060 = vmatpush1.bf16.msra.mxu0 0
  %1061 = vmatprep.subr.bf16.mxu0 0
  %1062 = vmatpush1.bf16.msra.mxu0 0
  %1063 = vmatprep.mubr.bf16.mxu0 0
  %1064 = vmatmul.mubr.bf16.gmra.mrb[0].mxu0 %v1029
  %v1065 = vpop.f32.mrb[0].mxu0
  %v1066 = vadd.f32 %v971, %v1065
  %v1067 = vpop.f32.mrb[0].mxu0
  %v1068 = vadd.f32 %v975, %v1067
  %v1069 = vpop.f32.mrb[0].mxu0
  %v1070 = vpop.f32.mrb[0].mxu0
  %1071 = vdwg.mxu0
  %1072 = vmatprep.subr.bf16.mxu0 %v1015
  %1073 = vmatpush1.bf16.msra.mxu0 %v1014
  %1074 = vmatprep.subr.bf16.mxu0 %v1019
  %1075 = vmatpush1.bf16.msra.mxu0 %v1018
  %1076 = vmatprep.subr.bf16.mxu0 0
  %1077 = vmatpush1.bf16.msra.mxu0 0
  %1078 = vmatprep.subr.bf16.mxu0 0
  %1079 = vmatpush1.bf16.msra.mxu0 0
  %1080 = vmatprep.subr.bf16.mxu0 0
  %1081 = vmatpush1.bf16.msra.mxu0 0
  %1082 = vmatprep.subr.bf16.mxu0 0
  %1083 = vmatpush1.bf16.msra.mxu0 0
  %1084 = vmatprep.subr.bf16.mxu0 0
  %1085 = vmatpush1.bf16.msra.mxu0 0
  %1086 = vmatprep.subr.bf16.mxu0 0
  %1087 = vmatpush1.bf16.msra.mxu0 0
  %1088 = vmatprep.subr.bf16.mxu0 0
  %1089 = vmatpush1.bf16.msra.mxu0 0
  %1090 = vmatprep.subr.bf16.mxu0 0
  %1091 = vmatpush1.bf16.msra.mxu0 0
  %1092 = vmatprep.subr.bf16.mxu0 0
  %1093 = vmatpush1.bf16.msra.mxu0 0
  %1094 = vmatprep.subr.bf16.mxu0 0
  %1095 = vmatpush1.bf16.msra.mxu0 0
  %1096 = vmatprep.subr.bf16.mxu0 0
  %1097 = vmatpush1.bf16.msra.mxu0 0
  %1098 = vmatprep.subr.bf16.mxu0 0
  %1099 = vmatpush1.bf16.msra.mxu0 0
  %1100 = vmatprep.subr.bf16.mxu0 0
  %1101 = vmatpush1.bf16.msra.mxu0 0
  %1102 = vmatprep.subr.bf16.mxu0 0
  %1103 = vmatpush1.bf16.msra.mxu0 0
  %1104 = vmatprep.mubr.bf16.mxu0 0
  %1105 = vmatmul.mubr.bf16.gmra.mrb[0].mxu0 %v1029
  %v1106 = vpop.f32.mrb[0].mxu0
  %v1107 = vadd.f32 %v979, %v1106
  %v1108 = vpop.f32.mrb[0].mxu0
  %v1109 = vadd.f32 %v983, %v1108
  %v1110 = vpop.f32.mrb[0].mxu0
  %v1111 = vpop.f32.mrb[0].mxu0
  %1112 = vdwg.mxu0
  %v1114 = vlaneseq
  %v1115 = vshrl.u32 %v1114, 7
  %v1116 = vsub.s32 0, %v1115
  %v1117 = vrot.slane %v83, %v1116
  %v1124 = vunpack.c.l.b16 %v55
  %v1125 = vunpack.c.l.b16 %v56
  %v1126 = vunpack.c.l.b16 %v57
  %v1127 = vunpack.c.l.b16 %v58
  %v1128 = vunpack.c.l.b16 %v59
  %v1129 = vpack.c.b16 %v1125, %v1124
  %v1130 = vpack.c.b16 %v1127, %v1126
  %v1131 = vpack.c.b16 %v1128, %v1128
  %v1135 = vsel %vm868, %v1131, 0
  %1137 = vmatprep.subr.bf16.mxu0 0
  %1138 = vmatpush1.bf16.msra.mxu0 %v1129
  %1139 = vmatprep.subr.bf16.mxu0 0
  %1140 = vmatpush1.bf16.msra.mxu0 %v1130
  %1141 = vmatprep.subr.bf16.mxu0 0
  %1142 = vmatpush1.bf16.msra.mxu0 %v1135
  %1143 = vmatprep.subr.bf16.mxu0 0
  %1144 = vmatpush1.bf16.msra.mxu0 0
  %1145 = vmatprep.subr.bf16.mxu0 0
  %1146 = vmatpush1.bf16.msra.mxu0 0
  %1147 = vmatprep.subr.bf16.mxu0 0
  %1148 = vmatpush1.bf16.msra.mxu0 0
  %1149 = vmatprep.subr.bf16.mxu0 0
  %1150 = vmatpush1.bf16.msra.mxu0 0
  %1151 = vmatprep.subr.bf16.mxu0 0
  %1152 = vmatpush1.bf16.msra.mxu0 0
  %1153 = vmatprep.subr.bf16.mxu0 0
  %1154 = vmatpush1.bf16.msra.mxu0 0
  %1155 = vmatprep.subr.bf16.mxu0 0
  %1156 = vmatpush1.bf16.msra.mxu0 0
  %1157 = vmatprep.subr.bf16.mxu0 0
  %1158 = vmatpush1.bf16.msra.mxu0 0
  %1159 = vmatprep.subr.bf16.mxu0 0
  %1160 = vmatpush1.bf16.msra.mxu0 0
  %1161 = vmatprep.subr.bf16.mxu0 0
  %1162 = vmatpush1.bf16.msra.mxu0 0
  %1163 = vmatprep.subr.bf16.mxu0 0
  %1164 = vmatpush1.bf16.msra.mxu0 0
  %1165 = vmatprep.subr.bf16.mxu0 0
  %1166 = vmatpush1.bf16.msra.mxu0 0
  %1167 = vmatprep.subr.bf16.mxu0 0
  %1168 = vmatpush1.bf16.msra.mxu0 0
  %1169 = vmatprep.mubr.bf16.mxu0 0
  %1170 = vmatmul.mubr.bf16.gmra.mrb[0].mxu0 %v866
  %v1171 = vpop.f32.mrb[0].mxu0
  %v1172 = vadd.f32 %v1117, %v1171
  %v1173 = vpop.f32.mrb[0].mxu0
  %v1174 = vpop.f32.mrb[0].mxu0
  %v1175 = vpop.f32.mrb[0].mxu0
  %1176 = vdwg.mxu0
  %v1177 = vmax.f32 %v1172, 0.0
  %v1178 = vpack.c.bf16 %v1177, %v1177
  %v1180 = vlaneseq
  %v1181 = vshrl.u32 %v1180, 7
  %v1182 = vsub.s32 0, %v1181
  %v1183 = vrot.slane %v87, %v1182
  %v1184 = vlaneseq
  %v1185 = vshrl.u32 %v1184, 7
  %v1186 = vsub.s32 1, %v1185
  %v1187 = vrot.slane %v87, %v1186
  %v1194 = vunpack.c.l.b16 %v76
  %v1195 = vunpack.c.h.b16 %v76
  %v1196 = vunpack.c.l.b16 %v77
  %v1197 = vunpack.c.h.b16 %v77
  %v1198 = vunpack.c.l.b16 %v78
  %v1199 = vunpack.c.h.b16 %v78
  %v1200 = vunpack.c.l.b16 %v79
  %v1201 = vunpack.c.h.b16 %v79
  %v1202 = vpack.c.b16 %v1196, %v1194
  %v1203 = vpack.c.b16 %v1197, %v1195
  %v1204 = vpack.c.b16 %v1200, %v1198
  %v1205 = vpack.c.b16 %v1201, %v1199
  %v1211 = vsel %vm214, %v1178, 0
  %1213 = vmatprep.subr.bf16.mxu0 %v1203
  %1214 = vmatpush1.bf16.msra.mxu0 %v1202
  %1215 = vmatprep.subr.bf16.mxu0 %v1205
  %1216 = vmatpush1.bf16.msra.mxu0 %v1204
  %1217 = vmatprep.subr.bf16.mxu0 0
  %1218 = vmatpush1.bf16.msra.mxu0 0
  %1219 = vmatprep.subr.bf16.mxu0 0
  %1220 = vmatpush1.bf16.msra.mxu0 0
  %1221 = vmatprep.subr.bf16.mxu0 0
  %1222 = vmatpush1.bf16.msra.mxu0 0
  %1223 = vmatprep.subr.bf16.mxu0 0
  %1224 = vmatpush1.bf16.msra.mxu0 0
  %1225 = vmatprep.subr.bf16.mxu0 0
  %1226 = vmatpush1.bf16.msra.mxu0 0
  %1227 = vmatprep.subr.bf16.mxu0 0
  %1228 = vmatpush1.bf16.msra.mxu0 0
  %1229 = vmatprep.subr.bf16.mxu0 0
  %1230 = vmatpush1.bf16.msra.mxu0 0
  %1231 = vmatprep.subr.bf16.mxu0 0
  %1232 = vmatpush1.bf16.msra.mxu0 0
  %1233 = vmatprep.subr.bf16.mxu0 0
  %1234 = vmatpush1.bf16.msra.mxu0 0
  %1235 = vmatprep.subr.bf16.mxu0 0
  %1236 = vmatpush1.bf16.msra.mxu0 0
  %1237 = vmatprep.subr.bf16.mxu0 0
  %1238 = vmatpush1.bf16.msra.mxu0 0
  %1239 = vmatprep.subr.bf16.mxu0 0
  %1240 = vmatpush1.bf16.msra.mxu0 0
  %1241 = vmatprep.subr.bf16.mxu0 0
  %1242 = vmatpush1.bf16.msra.mxu0 0
  %1243 = vmatprep.subr.bf16.mxu0 0
  %1244 = vmatpush1.bf16.msra.mxu0 0
  %1245 = vmatprep.mubr.bf16.mxu0 0
  %1246 = vmatmul.mubr.bf16.gmra.mrb[0].mxu0 %v1211
  %v1247 = vpop.f32.mrb[0].mxu0
  %v1248 = vadd.f32 %v1183, %v1247
  %v1249 = vpop.f32.mrb[0].mxu0
  %v1250 = vadd.f32 %v1187, %v1249
  %v1251 = vpop.f32.mrb[0].mxu0
  %v1252 = vpop.f32.mrb[0].mxu0
  %1253 = vdwg.mxu0
  %1254 = vst [vmem:[%s6 + $0x10] sm:$0xff] %v1248
  %1255 = vst [vmem:[%s6 + $0x18] sm:$0xff] %v1250
  %v1257 = vsel %vm568, %v116, 0
  %1259 = vmatprep.subr.mxu0 0.0
  %1260 = vmatpush1.msra.mxu0 %v115
  %1261 = vmatprep.subr.mxu0 0.0
  %1262 = vmatpush1.msra.mxu0 %v1257
  %1263 = vmatprep.subr.mxu0 0.0
  %1264 = vmatpush1.msra.mxu0 0.0
  %1265 = vmatprep.subr.mxu0 0.0
  %1266 = vmatpush1.msra.mxu0 0.0
  %1267 = vmatprep.subr.mxu0 0.0
  %1268 = vmatpush1.msra.mxu0 0.0
  %1269 = vmatprep.subr.mxu0 0.0
  %1270 = vmatpush1.msra.mxu0 0.0
  %1271 = vmatprep.subr.mxu0 0.0
  %1272 = vmatpush1.msra.mxu0 0.0
  %1273 = vmatprep.subr.mxu0 0.0
  %1274 = vmatpush1.msra.mxu0 0.0
  %1275 = vmatprep.subr.mxu0 0.0
  %1276 = vmatpush1.msra.mxu0 0.0
  %1277 = vmatprep.subr.mxu0 0.0
  %1278 = vmatpush1.msra.mxu0 0.0
  %1279 = vmatprep.subr.mxu0 0.0
  %1280 = vmatpush1.msra.mxu0 0.0
  %1281 = vmatprep.subr.mxu0 0.0
  %1282 = vmatpush1.msra.mxu0 0.0
  %1283 = vmatprep.subr.mxu0 0.0
  %1284 = vmatpush1.msra.mxu0 0.0
  %1285 = vmatprep.subr.mxu0 0.0
  %1286 = vmatpush1.msra.mxu0 0.0
  %1287 = vmatprep.subr.mxu0 0.0
  %1288 = vmatpush1.msra.mxu0 0.0
  %1289 = vmatprep.subr.mxu0 0.0
  %1290 = vmatpush1.msra.mxu0 0.0
  %1291 = vmatprep.subr.mxu0 0.0
  %1292 = vmatpush1.msra.mxu0 0.0
  %1293 = vmatprep.subr.mxu0 0.0
  %1294 = vmatpush1.msra.mxu0 0.0
  %1295 = vmatprep.subr.mxu0 0.0
  %1296 = vmatpush1.msra.mxu0 0.0
  %1297 = vmatprep.subr.mxu0 0.0
  %1298 = vmatpush1.msra.mxu0 0.0
  %1299 = vmatprep.subr.mxu0 0.0
  %1300 = vmatpush1.msra.mxu0 0.0
  %1301 = vmatprep.subr.mxu0 0.0
  %1302 = vmatpush1.msra.mxu0 0.0
  %1303 = vmatprep.subr.mxu0 0.0
  %1304 = vmatpush1.msra.mxu0 0.0
  %1305 = vmatprep.subr.mxu0 0.0
  %1306 = vmatpush1.msra.mxu0 0.0
  %1307 = vmatprep.subr.mxu0 0.0
  %1308 = vmatpush1.msra.mxu0 0.0
  %1309 = vmatprep.subr.mxu0 0.0
  %1310 = vmatpush1.msra.mxu0 0.0
  %1311 = vmatprep.subr.mxu0 0.0
  %1312 = vmatpush1.msra.mxu0 0.0
  %1313 = vmatprep.subr.mxu0 0.0
  %1314 = vmatpush1.msra.mxu0 0.0
  %1315 = vmatprep.subr.mxu0 0.0
  %1316 = vmatpush1.msra.mxu0 0.0
  %1317 = vmatprep.subr.mxu0 0.0
  %1318 = vmatpush1.msra.mxu0 0.0
  %1319 = vmatprep.subr.mxu0 0.0
  %1320 = vmatpush1.msra.mxu0 0.0
  %1321 = vmatprep.subr.mxu0 0.0
  %1322 = vmatpush1.msra.mxu0 0.0
  %1323 = vmatprep.mubr.f32.mxu0 0.0
  %1324 = vmatmul.mubr.f32.gmra.mrb[0].mxu0 %v693
  %v1325 = vpop.f32.mrb[0].mxu0
  %v1326 = vadd.f32 0.0, %v1325
  %v1327 = vpop.f32.mrb[0].mxu0
  %1328 = vdwg.mxu0
  %v1330 = vsel %vm137, %v1326, 0
  %1332 = vmatprep.subr.mxu0 0.0
  %1333 = vmatpush1.msra.mxu0 %v117
  %1334 = vmatprep.subr.mxu0 0.0
  %1335 = vmatpush1.msra.mxu0 %v118
  %1336 = vmatprep.subr.mxu0 0.0
  %1337 = vmatpush1.msra.mxu0 0.0
  %1338 = vmatprep.subr.mxu0 0.0
  %1339 = vmatpush1.msra.mxu0 0.0
  %1340 = vmatprep.subr.mxu0 0.0
  %1341 = vmatpush1.msra.mxu0 0.0
  %1342 = vmatprep.subr.mxu0 0.0
  %1343 = vmatpush1.msra.mxu0 0.0
  %1344 = vmatprep.subr.mxu0 0.0
  %1345 = vmatpush1.msra.mxu0 0.0
  %1346 = vmatprep.subr.mxu0 0.0
  %1347 = vmatpush1.msra.mxu0 0.0
  %1348 = vmatprep.subr.mxu0 0.0
  %1349 = vmatpush1.msra.mxu0 0.0
  %1350 = vmatprep.subr.mxu0 0.0
  %1351 = vmatpush1.msra.mxu0 0.0
  %1352 = vmatprep.subr.mxu0 0.0
  %1353 = vmatpush1.msra.mxu0 0.0
  %1354 = vmatprep.subr.mxu0 0.0
  %1355 = vmatpush1.msra.mxu0 0.0
  %1356 = vmatprep.subr.mxu0 0.0
  %1357 = vmatpush1.msra.mxu0 0.0
  %1358 = vmatprep.subr.mxu0 0.0
  %1359 = vmatpush1.msra.mxu0 0.0
  %1360 = vmatprep.subr.mxu0 0.0
  %1361 = vmatpush1.msra.mxu0 0.0
  %1362 = vmatprep.subr.mxu0 0.0
  %1363 = vmatpush1.msra.mxu0 0.0
  %1364 = vmatprep.subr.mxu0 0.0
  %1365 = vmatpush1.msra.mxu0 0.0
  %1366 = vmatprep.subr.mxu0 0.0
  %1367 = vmatpush1.msra.mxu0 0.0
  %1368 = vmatprep.subr.mxu0 0.0
  %1369 = vmatpush1.msra.mxu0 0.0
  %1370 = vmatprep.subr.mxu0 0.0
  %1371 = vmatpush1.msra.mxu0 0.0
  %1372 = vmatprep.subr.mxu0 0.0
  %1373 = vmatpush1.msra.mxu0 0.0
  %1374 = vmatprep.subr.mxu0 0.0
  %1375 = vmatpush1.msra.mxu0 0.0
  %1376 = vmatprep.subr.mxu0 0.0
  %1377 = vmatpush1.msra.mxu0 0.0
  %1378 = vmatprep.subr.mxu0 0.0
  %1379 = vmatpush1.msra.mxu0 0.0
  %1380 = vmatprep.subr.mxu0 0.0
  %1381 = vmatpush1.msra.mxu0 0.0
  %1382 = vmatprep.subr.mxu0 0.0
  %1383 = vmatpush1.msra.mxu0 0.0
  %1384 = vmatprep.subr.mxu0 0.0
  %1385 = vmatpush1.msra.mxu0 0.0
  %1386 = vmatprep.subr.mxu0 0.0
  %1387 = vmatpush1.msra.mxu0 0.0
  %1388 = vmatprep.subr.mxu0 0.0
  %1389 = vmatpush1.msra.mxu0 0.0
  %1390 = vmatprep.subr.mxu0 0.0
  %1391 = vmatpush1.msra.mxu0 0.0
  %1392 = vmatprep.subr.mxu0 0.0
  %1393 = vmatpush1.msra.mxu0 0.0
  %1394 = vmatprep.subr.mxu0 0.0
  %1395 = vmatpush1.msra.mxu0 0.0
  %1396 = vmatprep.mubr.f32.mxu0 0.0
  %1397 = vmatmul.mubr.f32.gmra.mrb[0].mxu0 %v1330
  %v1398 = vpop.f32.mrb[0].mxu0
  %v1399 = vadd.f32 0.0, %v1398
  %v1400 = vpop.f32.mrb[0].mxu0
  %1401 = vdwg.mxu0
  %v1402 = vmul.f32 %v1399, %v1326
  %v1403 = vsel %vm137, %v1402, 0.0
  %1404 = vadd.xlane.f32.xlu0 %v1403
  %v1405 = vpop.xlane.xlu0 %1404
  %v1406 = vrot.slane %v1405, 4
  %v1407 = vadd.f32 %v1405, %v1406
  %v1408 = vrot.slane %v1407, 2
  %v1409 = vadd.f32 %v1407, %v1408
  %v1410 = vrot.slane %v1409, 1
  %v1411 = vadd.f32 %v1409, %v1410
  %s1412 = vtos %v1411
  %v1413 = vstv %s1412
  %v1414 = vmul.f32 %v1413, 10.0
  %v1416 = vlaneseq
  %v1417 = vshrl.u32 %v1416, 7
  %v1418 = vsub.s32 0, %v1417
  %v1419 = vrot.slane %v89, %v1418
  %v1421 = vsub.f32 %v1419, %v683
  %v1423 = vsel %vm864, %v1421, 0
  %1425 = vmatprep.subr.mxu0 0.0
  %1426 = vmatpush1.msra.mxu0 %v119
  %1427 = vmatprep.subr.mxu0 0.0
  %1428 = vmatpush1.msra.mxu0 %v120
  %1429 = vmatprep.subr.mxu0 0.0
  %1430 = vmatpush1.msra.mxu0 %v121
  %1431 = vmatprep.subr.mxu0 0.0
  %1432 = vmatpush1.msra.mxu0 %v122
  %1433 = vmatprep.subr.mxu0 0.0
  %1434 = vmatpush1.msra.mxu0 %v123
  %1435 = vmatprep.subr.mxu0 0.0
  %1436 = vmatpush1.msra.mxu0 0.0
  %1437 = vmatprep.subr.mxu0 0.0
  %1438 = vmatpush1.msra.mxu0 0.0
  %1439 = vmatprep.subr.mxu0 0.0
  %1440 = vmatpush1.msra.mxu0 0.0
  %1441 = vmatprep.subr.mxu0 0.0
  %1442 = vmatpush1.msra.mxu0 0.0
  %1443 = vmatprep.subr.mxu0 0.0
  %1444 = vmatpush1.msra.mxu0 0.0
  %1445 = vmatprep.subr.mxu0 0.0
  %1446 = vmatpush1.msra.mxu0 0.0
  %1447 = vmatprep.subr.mxu0 0.0
  %1448 = vmatpush1.msra.mxu0 0.0
  %1449 = vmatprep.subr.mxu0 0.0
  %1450 = vmatpush1.msra.mxu0 0.0
  %1451 = vmatprep.subr.mxu0 0.0
  %1452 = vmatpush1.msra.mxu0 0.0
  %1453 = vmatprep.subr.mxu0 0.0
  %1454 = vmatpush1.msra.mxu0 0.0
  %1455 = vmatprep.subr.mxu0 0.0
  %1456 = vmatpush1.msra.mxu0 0.0
  %1457 = vmatprep.subr.mxu0 0.0
  %1458 = vmatpush1.msra.mxu0 0.0
  %1459 = vmatprep.subr.mxu0 0.0
  %1460 = vmatpush1.msra.mxu0 0.0
  %1461 = vmatprep.subr.mxu0 0.0
  %1462 = vmatpush1.msra.mxu0 0.0
  %1463 = vmatprep.subr.mxu0 0.0
  %1464 = vmatpush1.msra.mxu0 0.0
  %1465 = vmatprep.subr.mxu0 0.0
  %1466 = vmatpush1.msra.mxu0 0.0
  %1467 = vmatprep.subr.mxu0 0.0
  %1468 = vmatpush1.msra.mxu0 0.0
  %1469 = vmatprep.subr.mxu0 0.0
  %1470 = vmatpush1.msra.mxu0 0.0
  %1471 = vmatprep.subr.mxu0 0.0
  %1472 = vmatpush1.msra.mxu0 0.0
  %1473 = vmatprep.subr.mxu0 0.0
  %1474 = vmatpush1.msra.mxu0 0.0
  %1475 = vmatprep.subr.mxu0 0.0
  %1476 = vmatpush1.msra.mxu0 0.0
  %1477 = vmatprep.subr.mxu0 0.0
  %1478 = vmatpush1.msra.mxu0 0.0
  %1479 = vmatprep.subr.mxu0 0.0
  %1480 = vmatpush1.msra.mxu0 0.0
  %1481 = vmatprep.subr.mxu0 0.0
  %1482 = vmatpush1.msra.mxu0 0.0
  %1483 = vmatprep.subr.mxu0 0.0
  %1484 = vmatpush1.msra.mxu0 0.0
  %1485 = vmatprep.subr.mxu0 0.0
  %1486 = vmatpush1.msra.mxu0 0.0
  %1487 = vmatprep.subr.mxu0 0.0
  %1488 = vmatpush1.msra.mxu0 0.0
  %1489 = vmatprep.mubr.f32.mxu0 0.0
  %1490 = vmatmul.mubr.f32.gmra.mrb[0].mxu0 %v1423
  %v1491 = vpop.f32.mrb[0].mxu0
  %v1492 = vadd.f32 0.0, %v1491
  %v1493 = vpop.f32.mrb[0].mxu0
  %1494 = vdwg.mxu0
  %v1495 = vmul.f32 %v1492, %v1421
  %v1496 = vsel %vm864, %v1495, 0.0
  %1497 = vadd.xlane.f32.xlu0 %v1496
  %v1498 = vpop.xlane.xlu0 %1497
  %v1499 = vrot.slane %v1498, 4
  %v1500 = vadd.f32 %v1498, %v1499
  %v1501 = vrot.slane %v1500, 2
  %v1502 = vadd.f32 %v1500, %v1501
  %v1503 = vrot.slane %v1502, 1
  %v1504 = vadd.f32 %v1502, %v1503
  %s1505 = vtos %v1504
  %v1506 = vstv %s1505
  %vm1507 = vcmp.gt.f32.partialorder %v90, 0.5
  %v1508 = vand.u32 2147483647, %v685
  %v1509 = vmax.f32 %v1508, 1e-08
  %v1510 = vsel %vm1507, 1, 0
  %v1511 = vlaneseq
  %v1512 = vshrl.u32 %v1511, 7
  %v1513 = vsub.s32 0, %v1512
  %v1514 = vrot.slane %v1510, %v1513
  %vm1515 = vcmp.eq.s32.totalorder %v1514, 1
  %v1516 = vsel %vm1515, %v1509, 1.0
  %v1517 = vlog2.pop %v1516
  %v1518 = vmul.f32 %v1517, 0.6931472
  %v1519 = vsel %vm691, %v1518, 0.0
  %1520 = vadd.xlane.f32.xlu0 %v1519
  %v1521 = vpop.xlane.xlu0 %1520
  %v1522 = vrot.slane %v1521, 4
  %v1523 = vadd.f32 %v1521, %v1522
  %v1524 = vrot.slane %v1523, 2
  %v1525 = vadd.f32 %v1523, %v1524
  %v1526 = vrot.slane %v1525, 1
  %v1527 = vadd.f32 %v1525, %v1526
  %s1528 = vtos %v1527
  %v1529 = vstv %s1528
  %v1530 = vmul.f32 %v1529, 20.0
  %v1531 = vadd.f32 %v1414, %v1506
  %v1532 = vsub.f32 %v1531, 320.0
  %v1533 = vadd.f32 %v1532, -834.5955
  %v1534 = vsub.f32 %v1533, %v1530
  %v1535 = vmul.f32 %v1534, 0.5
  %v1536 = vrcp.pop 8.0
  %v1537 = vmul.f32 %v1535, %v1536
  %v1538 = vlog2.pop %v508
  %v1539 = vmul.f32 %v1538, 0.6931472
  %v1540 = vsub.f32 0.0, %v1109
  %v1541 = vmul.f32 %v1540, 1.442695
  %v1542 = vpow.pop %v1541
  %v1543 = vsub.f32 %v500, %v1068
  %v1544 = vsub.f32 %v1109, %v1539
  %v1545 = vsub.f32 %v1544, 1.0
  %v1546 = vmul.f32 %v1542, %v508
  %v1547 = vadd.f32 %v1545, %v1546
  %v1548 = vmul.f32 %v1543, %v1543
  %v1549 = vmul.f32 %v1548, %v1542
  %v1550 = vadd.f32 %v1547, %v1549
  %v1551 = vsel %vm564, %v1550, 0.0
  %1552 = vadd.xlane.f32.xlu0 %v1551
  %v1553 = vpop.xlane.xlu0 %1552
  %v1554 = vrot.slane %v1553, 4
  %v1555 = vadd.f32 %v1553, %v1554
  %v1556 = vrot.slane %v1555, 2
  %v1557 = vadd.f32 %v1555, %v1556
  %v1558 = vrot.slane %v1557, 1
  %v1559 = vadd.f32 %v1557, %v1558
  %s1560 = vtos %v1559
  %v1561 = vstv %s1560
  %v1562 = vmul.f32 %v1561, 0.5
  %v1563 = vmul.f32 %v1562, %v1536
  %v1564 = vsub.f32 %v24, %v1248
  %v1565 = vsub.f32 0.0, %v1250
  %v1566 = vmul.f32 %v1565, 1.442695
  %v1567 = vpow.pop %v1566
  %v1568 = vmul.f32 %v1567, %v1564
  %v1569 = vmul.f32 %v1568, %v1564
  %v1570 = vadd.f32 %v1250, %v1569
  %v1571 = vadd.f32 %v1570, 1.837877
  %v1572 = vsel %vm137, %v1571, 0.0
  %1573 = vadd.xlane.f32.xlu0 %v1572
  %v1574 = vpop.xlane.xlu0 %1573
  %v1575 = vrot.slane %v1574, 4
  %v1576 = vadd.f32 %v1574, %v1575
  %v1577 = vrot.slane %v1576, 2
  %v1578 = vadd.f32 %v1576, %v1577
  %v1579 = vrot.slane %v1578, 1
  %v1580 = vadd.f32 %v1578, %v1579
  %s1581 = vtos %v1580
  %v1582 = vstv %s1581
  %v1583 = vmul.f32 %v1582, 0.5
  %v1584 = vmul.f32 %v1583, %v1536
  %v1585 = vsub.f32 %v263, %v253
  %v1586 = vsub.f32 0.0, %v255
  %v1587 = vmul.f32 %v1586, 1.442695
  %v1588 = vpow.pop %v1587
  %v1589 = vmul.f32 %v1588, %v1585
  %v1590 = vmul.f32 %v1589, %v1585
  %v1591 = vadd.f32 %v255, %v1590
  %v1592 = vadd.f32 %v1591, 1.837877
  %v1593 = vsel %vm272, %v1592, 0.0
  %1594 = vadd.xlane.f32.xlu0 %v1593
  %v1595 = vpop.xlane.xlu0 %1594
  %v1596 = vrot.slane %v1595, 4
  %v1597 = vadd.f32 %v1595, %v1596
  %v1598 = vrot.slane %v1597, 2
  %v1599 = vadd.f32 %v1597, %v1598
  %v1600 = vrot.slane %v1599, 1
  %v1601 = vadd.f32 %v1599, %v1600
  %s1602 = vtos %v1601
  %v1603 = vstv %s1602
  %v1604 = vmul.f32 %v1603, 0.5
  %v1605 = vmul.f32 %v1604, %v1536
  %v1606 = vsub.f32 %v1584, %v1605
  %v1607 = vsub.f32 %v263, %v1066
  %v1608 = vsub.f32 0.0, %v1107
  %v1609 = vmul.f32 %v1608, 1.442695
  %v1610 = vpow.pop %v1609
  %v1611 = vmul.f32 %v1610, %v1607
  %v1612 = vmul.f32 %v1611, %v1607
  %v1613 = vadd.f32 %v1107, %v1612
  %v1614 = vadd.f32 %v1613, 1.837877
  %v1615 = vsel %vm272, %v1614, 0.0
  %1616 = vadd.xlane.f32.xlu0 %v1615
  %v1617 = vpop.xlane.xlu0 %1616
  %v1618 = vrot.slane %v1617, 4
  %v1619 = vadd.f32 %v1617, %v1618
  %v1620 = vrot.slane %v1619, 2
  %v1621 = vadd.f32 %v1619, %v1620
  %v1622 = vrot.slane %v1621, 1
  %v1623 = vadd.f32 %v1621, %v1622
  %s1624 = vtos %v1623
  %v1625 = vstv %s1624
  %v1626 = vmul.f32 %v1625, 0.5
  %v1627 = vmul.f32 %v1626, %v1536
  %v1628 = vadd.f32 %v1606, %v1627
  %v1629 = vadd.f32 %v1537, %v1563
  %1630 = vst [vmem:[%s6 + $0x20] sm:$0xff] %v1629
  %1631 = vst [vmem:[%s6 + $0x28] sm:$0xff] %v1628
  // Predicated region
  $region26: #{vgp_forward.1} parent=0 // pred_check
    _
  $region27: #{vgp_forward.1} parent=0 // pred_check_branch
    %1633 = sbr.rel (0) target = $region29
  $region28: #{vgp_forward.1} parent=0 // pred_region
    _
  $region29: #{vgp_forward.1} parent=0 // pred_fallthru
    _
  // Predicated region
  $region30: #{vgp_forward.1} parent=0 // pred_check
    _
  $region31: #{vgp_forward.1} parent=0 // pred_check_branch
    %1635 = sbr.rel (0) target = $region33
  $region32: #{vgp_forward.1} parent=0 // pred_region
    _
  $region33: #{vgp_forward.1} parent=0 // pred_fallthru
    _

</llo_original>
